<compile_context>
chip_gen: v5e
topology: v5e:2x2
jax: 0.10.0
libtpu: 0.0.40
codegen_flags: <defaults>
</compile_context>

<pallas_src>
import math

import jax
import jax.numpy as jnp
from jax.experimental import pallas as pl
from jax.experimental.pallas import tpu as pltpu


def _attn_pool_kernel(x_ref, kpos_ref, vpos_ref, kcorr_ref, vcorr_ref,
                      wq_ref, bq_ref, wk_ref, wv_ref, wc_ref, bc_ref,
                      seg_ref, segt_ref, o_ref):
    B, HW, C = x_ref.shape
    nh = seg_ref.shape[1]                                   # lane-padded head count

    xs = x_ref[...]                                         # native dtype (B, HW, C)
    x_bf = xs.astype(jnp.bfloat16).reshape(B * HW, C)
    # NOTE: HW=16 here (multiple of 8) so the (B,HW,C)<->(B*HW,C) reshapes are
    # free; for HW=49 production they incur a relayout.
    # TODO(synk): switch to a rank-3 contraction once Mosaic handles it cleanly.

    # ---- spatial K / V projections (bf16 MXU operands, f32 accumulation).
    # Positional embedding and bias are pre-projected on the host into the
    # (HW, C) kpos / vpos terms (linearity), so x goes straight to the MXU.
    k_sp = (jnp.dot(x_bf, wk_ref[...], preferred_element_type=jnp.float32)
            .reshape(B, HW, C) + kpos_ref[...][None])       # (B, HW, C)
    v_sp = (jnp.dot(x_bf, wv_ref[...], preferred_element_type=jnp.float32)
            .reshape(B, HW, C) + vpos_ref[...][None])

    # ---- CLS query from the mean token (pos_cls, bias and 1/sqrt(hd) are
    # already folded into wq/bq on the host).
    cls = jnp.mean(xs.astype(jnp.float32), axis=1)          # (B, C)
    q = jnp.dot(cls.astype(jnp.bfloat16), wq_ref[...],
                preferred_element_type=jnp.float32) + bq_ref[...]   # (B, C)

    # ---- CLS key/value by linearity of the projection w.r.t. the mean token.
    k_cls = jnp.mean(k_sp, axis=1) + kcorr_ref[...]         # (B, C)
    v_cls = jnp.mean(v_sp, axis=1) + vcorr_ref[...]

    # ---- per-head scores via the (C, nh) block-indicator matmul (no head
    # loop, no narrow-lane slices).  These matmuls are small; kept in f32.
    seg = seg_ref[...]                                      # (C, nh)
    s_cls = jnp.dot(k_cls * q, seg,
                    preferred_element_type=jnp.float32)     # (B, nh)
    s_sp = jnp.dot((k_sp * q[:, None, :]).reshape(B * HW, C), seg,
                   preferred_element_type=jnp.float32).reshape(B, HW, nh)

    # ---- softmax over the HW + 1 keys (CLS key + spatial keys).
    m = jnp.maximum(s_cls, jnp.max(s_sp, axis=1))           # (B, nh)
    p_cls = jnp.exp(s_cls - m)
    p_sp = jnp.exp(s_sp - m[:, None, :])
    inv = pl.reciprocal(p_cls + jnp.sum(p_sp, axis=1), approx=True)   # (B, nh)
    p_cls = p_cls * inv
    p_sp = p_sp * inv[:, None, :]

    # ---- expand per-head probabilities back to channels and weight values.
    segt = segt_ref[...]                                    # (nh, C)
    pe_cls = jnp.dot(p_cls, segt, preferred_element_type=jnp.float32)   # (B, C)
    pe_sp = jnp.dot(p_sp.reshape(B * HW, nh), segt,
                    preferred_element_type=jnp.float32).reshape(B, HW, C)
    o = pe_cls * v_cls + jnp.sum(pe_sp * v_sp, axis=1)      # (B, C)

    # ---- output projection, dense (B, O) store.
    o_ref[...] = (jnp.dot(o.astype(jnp.bfloat16), wc_ref[...],
                          preferred_element_type=jnp.float32)
                  + bc_ref[...]).astype(o_ref.dtype)


def attention_pool2d(x_nchw, params, num_heads, *, batch_block=32):
    """Pallas implementation of AttentionPool2d.forward. x_nchw: (N, C, H, W)."""
    N, C, H, W = x_nchw.shape
    HW = H * W
    assert C % num_heads == 0
    head_dim = C // num_heads
    O = params["wc"].shape[0]
    scale = 1.0 / math.sqrt(head_dim)

    # Single layout change: NCHW -> (N, HW, C), streamed in x's native dtype.
    x = x_nchw.reshape(N, C, HW).transpose(0, 2, 1)

    # Batch blocking (v7x note: pick batch_block so the grid length is >= 2 and
    # even, letting the "parallel" axis shard across both TensorCores).
    bb = N if N < batch_block else batch_block
    n_pad = pl.cdiv(N, bb) * bb
    if n_pad != N:
        x = jnp.pad(x, ((0, n_pad - N), (0, 0), (0, 0)))

    # ---- host-side parameter folding (all exact, f32) ----
    wq_f = params["wq"].T.astype(jnp.float32)               # (C, C)  (in, out)
    wk_f = params["wk"].T.astype(jnp.float32)
    wv_f = params["wv"].T.astype(jnp.float32)
    wc_f = params["wc"].T.astype(jnp.float32)               # (C, O)

    pos = params["pos_emb"].astype(jnp.float32)
    pos_cls, pos_sp = pos[0:1, :], pos[1:, :]
    pos_mean = jnp.mean(pos_sp, axis=0, keepdims=True)

    # q projection: fold pos_cls and the 1/sqrt(head_dim) scale into Wq / bq.
    wq_t = (wq_f * scale).astype(jnp.bfloat16)
    bq = ((params["bq"].reshape(1, C) + pos_cls @ wq_f) * scale).astype(jnp.float32)

    # k / v projections: bf16 weights; pos_sp projection + bias folded into
    # (HW, C) additive terms; CLS correction from linearity of the mean.
    wk_t = wk_f.astype(jnp.bfloat16)
    wv_t = wv_f.astype(jnp.bfloat16)
    kpos = (pos_sp @ wk_f + params["bk"].reshape(1, C)).astype(jnp.float32)   # (HW, C)
    vpos = (pos_sp @ wv_f + params["bv"].reshape(1, C)).astype(jnp.float32)
    kcorr = ((pos_cls - pos_mean) @ wk_f).astype(jnp.float32)                 # (1, C)
    vcorr = ((pos_cls - pos_mean) @ wv_f).astype(jnp.float32)

    wc_t = wc_f.astype(jnp.bfloat16)
    bc = params["bc"].reshape(1, O).astype(jnp.float32)

    # Lane-dense head block-indicator: pad heads to a multiple of 128 so the
    # (B, nh)/(B, HW, nh) softmax tensors fill whole vregs.  Padded heads have
    # all-zero SEG^T rows and contribute nothing.
    nh_pad = pl.cdiv(num_heads, 128) * 128
    seg = (jnp.arange(C)[:, None] // head_dim
           == jnp.arange(nh_pad)[None, :]).astype(jnp.float32)    # (C, nh_pad)
    seg_t = seg.T                                                 # (nh_pad, C)

    # VMEM limit: leave headroom for Mosaic scratch and I/O buffers
    # (v7x has only 64 MiB physical VMEM per TensorCore).
    try:
        cap = pltpu.get_tpu_info().vmem_capacity_bytes
        vmem_limit = min(int(0.85 * cap), 96 * 1024 * 1024)
    except Exception:
        vmem_limit = 48 * 1024 * 1024

    def run(invariant_buffering):
        if invariant_buffering is None:
            def rep(shape):
                return pl.BlockSpec(shape, lambda n: (0,) * len(shape))
        else:
            def rep(shape):
                return pl.BlockSpec(shape, lambda n: (0,) * len(shape),
                                    pipeline_mode=invariant_buffering)
        grid_spec = pltpu.PrefetchScalarGridSpec(
            num_scalar_prefetch=0,
            grid=(n_pad // bb,),
            in_specs=[
                pl.BlockSpec((bb, HW, C), lambda n: (n, 0, 0)),   # streamed tokens
                rep((HW, C)), rep((HW, C)),                        # kpos, vpos
                rep((1, C)), rep((1, C)),                          # kcorr, vcorr
                rep((C, C)), rep((1, C)),                          # Wq^T (scaled), bq
                rep((C, C)), rep((C, C)),                          # Wk^T, Wv^T (bf16)
                rep((C, O)), rep((1, O)),                          # Wc^T, bc
                rep((C, nh_pad)), rep((nh_pad, C)),                # SEG, SEG^T
            ],
            out_specs=pl.BlockSpec((bb, O), lambda n: (n, 0)),
        )
        return pl.pallas_call(
            _attn_pool_kernel,
            out_shape=jax.ShapeDtypeStruct((n_pad, O), jnp.float32),
            grid_spec=grid_spec,
            compiler_params=pltpu.CompilerParams(
                dimension_semantics=("parallel",),
                vmem_limit_bytes=vmem_limit),
        )(x, kpos, vpos, kcorr, vcorr, wq_t, bq, wk_t, wv_t, wc_t, bc, seg, seg_t)

    try:
        # Single-buffer the grid-invariant weights (constant index_map) to halve
        # their resident VMEM footprint.
        out = run(pl.Buffered(1))
    except Exception:
        # TODO(synk): drop this fallback once pl.Buffered(1) is guaranteed on
        # the deployed jaxlib; it only costs extra VMEM, not correctness.
        out = run(None)

    return out[:N]


def attention_pool2d_reference(x_nchw, params, num_heads):
    """Pure-JAX reference mirroring F.multi_head_attention_forward semantics."""
    N, C, H, W = x_nchw.shape
    hd = C // num_heads
    x = x_nchw.reshape(N, C, H * W).transpose(2, 0, 1)             # (HW, N, C)
    x = jnp.concatenate([x.mean(axis=0, keepdims=True), x], 0)     # (L, N, C)
    x = x + params["pos_emb"][:, None, :]
    q = x[:1] @ params["wq"].T + params["bq"]                      # (1, N, C)
    k = x @ params["wk"].T + params["bk"]                          # (L, N, C)
    v = x @ params["wv"].T + params["bv"]
    q = q.reshape(1, N, num_heads, hd).transpose(1, 2, 0, 3)       # (N, H, 1, hd)
    k = k.reshape(-1, N, num_heads, hd).transpose(1, 2, 0, 3)      # (N, H, L, hd)
    v = v.reshape(-1, N, num_heads, hd).transpose(1, 2, 0, 3)
    s = jnp.einsum("nhqd,nhkd->nhqk", q, k) / math.sqrt(hd)
    p = jax.nn.softmax(s, axis=-1)
    o = jnp.einsum("nhqk,nhkd->nhqd", p, v)                        # (N, H, 1, hd)
    o = o.transpose(2, 0, 1, 3).reshape(N, C)
    return o @ params["wc"].T + params["bc"]


def init_params(key, spacial_dim, embed_dim, output_dim):
    keys = jax.random.split(key, 9)
    C, O = embed_dim, output_dim
    return {
        "pos_emb": jax.random.normal(keys[0], (spacial_dim ** 2 + 1, C),
                                     jnp.float32) / math.sqrt(C),
        "wq": jax.random.normal(keys[1], (C, C), jnp.float32) / math.sqrt(C),
        "bq": jax.random.normal(keys[2], (C,), jnp.float32) * 0.02,
        "wk": jax.random.normal(keys[3], (C, C), jnp.float32) / math.sqrt(C),
        "bk": jax.random.normal(keys[4], (C,), jnp.float32) * 0.02,
        "wv": jax.random.normal(keys[5], (C, C), jnp.float32) / math.sqrt(C),
        "bv": jax.random.normal(keys[6], (C,), jnp.float32) * 0.02,
        "wc": jax.random.normal(keys[7], (O, C), jnp.float32) / math.sqrt(C),
        "bc": jax.random.normal(keys[8], (O,), jnp.float32) * 0.02,
    }


def _check(out, ref, name):
    # bf16 MXU operands + approx reciprocal: check max abs error against the
    # output scale (a few percent is expected and acceptable).
    err = float(jnp.max(jnp.abs(out - ref)))
    scl = float(jnp.max(jnp.abs(ref)))
    assert err <= 4e-2 * max(scl, 1.0), (
        f"{name}: max abs err {err:.4e} vs ref scale {scl:.3f}")


if __name__ == "__main__":
    # Small shapes consistent with the module's forward:
    # input (N, embed_dim, spacial_dim, spacial_dim).
    spacial_dim = 4
    embed_dim = 32
    num_heads = 4
    output_dim = 16

    key = jax.random.PRNGKey(0)
    k_x, k_p, k_x2 = jax.random.split(key, 3)
    params = init_params(k_p, spacial_dim, embed_dim, output_dim)

    # Case 1: batch smaller than the batch block (bb = N path, single grid step).
    x1 = jax.random.normal(k_x, (2, embed_dim, spacial_dim, spacial_dim),
                           jnp.float32)
    out1 = jax.block_until_ready(attention_pool2d(x1, params, num_heads))
    assert out1.shape == (2, output_dim)
    _check(out1, attention_pool2d_reference(x1, params, num_heads), "N=2")

    # Case 2: batch needing padding and a multi-step grid (N=10, bb=8 -> pad 16).
    x2 = jax.random.normal(k_x2, (10, embed_dim, spacial_dim, spacial_dim),
                           jnp.float32)
    out2 = jax.block_until_ready(
        attention_pool2d(x2, params, num_heads, batch_block=8))
    assert out2.shape == (10, output_dim)
    _check(out2, attention_pool2d_reference(x2, params, num_heads), "N=10")

    print("KERNEL_OK")
</pallas_src>

<mosaic_0001>
module attributes {stable_mosaic.version = 11 : i64} {
  func.func @_attn_pool_kernel(%arg0: i32, %arg1: memref<2x16x32xf32, #tpu.memory_space<vmem>>, %arg2: memref<16x32xf32, #tpu.memory_space<vmem>>, %arg3: memref<16x32xf32, #tpu.memory_space<vmem>>, %arg4: memref<1x32xf32, #tpu.memory_space<vmem>>, %arg5: memref<1x32xf32, #tpu.memory_space<vmem>>, %arg6: memref<32x32xbf16, #tpu.memory_space<vmem>>, %arg7: memref<1x32xf32, #tpu.memory_space<vmem>>, %arg8: memref<32x32xbf16, #tpu.memory_space<vmem>>, %arg9: memref<32x32xbf16, #tpu.memory_space<vmem>>, %arg10: memref<32x16xbf16, #tpu.memory_space<vmem>>, %arg11: memref<1x16xf32, #tpu.memory_space<vmem>>, %arg12: memref<32x128xf32, #tpu.memory_space<vmem>>, %arg13: memref<128x32xf32, #tpu.memory_space<vmem>>, %arg14: memref<2x16xf32, #tpu.memory_space<vmem>>) attributes {dimension_semantics = [#tpu.dimension_semantics<parallel>], iteration_bounds = array<i64: 1>, scalar_prefetch = 0 : i64, scratch_operands = 0 : i64, tpu.core_type = #tpu.core_type<tc>, window_params = [{transform_indices = @transform_0, window_bounds = array<i64: 2, 16, 32>}, {pipeline_mode = #tpu.pipeline_mode<synchronous>, transform_indices = @transform_1, window_bounds = array<i64: 16, 32>}, {pipeline_mode = #tpu.pipeline_mode<synchronous>, transform_indices = @transform_2, window_bounds = array<i64: 16, 32>}, {pipeline_mode = #tpu.pipeline_mode<synchronous>, transform_indices = @transform_3, window_bounds = array<i64: 1, 32>}, {pipeline_mode = #tpu.pipeline_mode<synchronous>, transform_indices = @transform_4, window_bounds = array<i64: 1, 32>}, {pipeline_mode = #tpu.pipeline_mode<synchronous>, transform_indices = @transform_5, window_bounds = array<i64: 32, 32>}, {pipeline_mode = #tpu.pipeline_mode<synchronous>, transform_indices = @transform_6, window_bounds = array<i64: 1, 32>}, {pipeline_mode = #tpu.pipeline_mode<synchronous>, transform_indices = @transform_7, window_bounds = array<i64: 32, 32>}, {pipeline_mode = #tpu.pipeline_mode<synchronous>, transform_indices = @transform_8, window_bounds = array<i64: 32, 32>}, {pipeline_mode = #tpu.pipeline_mode<synchronous>, transform_indices = @transform_9, window_bounds = array<i64: 32, 16>}, {pipeline_mode = #tpu.pipeline_mode<synchronous>, transform_indices = @transform_10, window_bounds = array<i64: 1, 16>}, {pipeline_mode = #tpu.pipeline_mode<synchronous>, transform_indices = @transform_11, window_bounds = array<i64: 32, 128>}, {pipeline_mode = #tpu.pipeline_mode<synchronous>, transform_indices = @transform_12, window_bounds = array<i64: 128, 32>}, {transform_indices = @transform_13, window_bounds = array<i64: 2, 16>}]} {
    %c0 = arith.constant 0 : index
    %c0_0 = arith.constant 0 : index
    %c0_1 = arith.constant 0 : index
    %0 = vector.load %arg1[%c0, %c0_0, %c0_1] : memref<2x16x32xf32, #tpu.memory_space<vmem>>, vector<2x16x32xf32>
    %1 = arith.truncf %0 : vector<2x16x32xf32> to vector<2x16x32xbf16>
    %2 = vector.shape_cast %1 : vector<2x16x32xbf16> to vector<32x32xbf16>
    %c0_2 = arith.constant 0 : index
    %c0_3 = arith.constant 0 : index
    %3 = vector.load %arg8[%c0_2, %c0_3] : memref<32x32xbf16, #tpu.memory_space<vmem>>, vector<32x32xbf16>
    %cst = arith.constant dense<0.000000e+00> : vector<32x32xf32>
    %4 = tpu.matmul %2, %3, %cst {dimension_numbers = #tpu.dot_dimension_numbers<[1], [0], [0], [1], [0, 0, 1, 1], [], []>} : vector<32x32xbf16>, vector<32x32xbf16>, vector<32x32xf32> -> vector<32x32xf32>
    %5 = vector.shape_cast %4 : vector<32x32xf32> to vector<2x16x32xf32>
    %c0_4 = arith.constant 0 : index
    %c0_5 = arith.constant 0 : index
    %6 = vector.load %arg2[%c0_4, %c0_5] : memref<16x32xf32, #tpu.memory_space<vmem>>, vector<16x32xf32>
    %7 = vector.shape_cast %6 : vector<16x32xf32> to vector<1x16x32xf32>
    %8 = vector.broadcast %7 : vector<1x16x32xf32> to vector<2x16x32xf32>
    %9 = arith.addf %5, %8 : vector<2x16x32xf32>
    %c0_6 = arith.constant 0 : index
    %c0_7 = arith.constant 0 : index
    %10 = vector.load %arg9[%c0_6, %c0_7] : memref<32x32xbf16, #tpu.memory_space<vmem>>, vector<32x32xbf16>
    %cst_8 = arith.constant dense<0.000000e+00> : vector<32x32xf32>
    %11 = tpu.matmul %2, %10, %cst_8 {dimension_numbers = #tpu.dot_dimension_numbers<[1], [0], [0], [1], [0, 0, 1, 1], [], []>} : vector<32x32xbf16>, vector<32x32xbf16>, vector<32x32xf32> -> vector<32x32xf32>
    %12 = vector.shape_cast %11 : vector<32x32xf32> to vector<2x16x32xf32>
    %c0_9 = arith.constant 0 : index
    %c0_10 = arith.constant 0 : index
    %13 = vector.load %arg3[%c0_9, %c0_10] : memref<16x32xf32, #tpu.memory_space<vmem>>, vector<16x32xf32>
    %14 = vector.shape_cast %13 : vector<16x32xf32> to vector<1x16x32xf32>
    %15 = vector.broadcast %14 : vector<1x16x32xf32> to vector<2x16x32xf32>
    %16 = arith.addf %12, %15 : vector<2x16x32xf32>
    %cst_11 = arith.constant dense<0.000000e+00> : vector<2x32xf32>
    %17 = vector.multi_reduction <add>, %0, %cst_11 [1] : vector<2x16x32xf32> to vector<2x32xf32>
    %cst_12 = arith.constant 1.600000e+01 : f32
    %18 = vector.broadcast %cst_12 : f32 to vector<2x32xf32>
    %19 = arith.divf %17, %18 : vector<2x32xf32>
    %20 = arith.truncf %19 : vector<2x32xf32> to vector<2x32xbf16>
    %c0_13 = arith.constant 0 : index
    %c0_14 = arith.constant 0 : index
    %21 = vector.load %arg6[%c0_13, %c0_14] : memref<32x32xbf16, #tpu.memory_space<vmem>>, vector<32x32xbf16>
    %cst_15 = arith.constant dense<0.000000e+00> : vector<2x32xf32>
    %22 = tpu.matmul %20, %21, %cst_15 {dimension_numbers = #tpu.dot_dimension_numbers<[1], [0], [0], [1], [0, 0, 1, 1], [], []>} : vector<2x32xbf16>, vector<32x32xbf16>, vector<2x32xf32> -> vector<2x32xf32>
    %c0_16 = arith.constant 0 : index
    %c0_17 = arith.constant 0 : index
    %23 = vector.load %arg7[%c0_16, %c0_17] : memref<1x32xf32, #tpu.memory_space<vmem>>, vector<1x32xf32>
    %24 = vector.broadcast %23 : vector<1x32xf32> to vector<2x32xf32>
    %25 = arith.addf %22, %24 : vector<2x32xf32>
    %cst_18 = arith.constant dense<0.000000e+00> : vector<2x32xf32>
    %26 = vector.multi_reduction <add>, %9, %cst_18 [1] : vector<2x16x32xf32> to vector<2x32xf32>
    %cst_19 = arith.constant 1.600000e+01 : f32
    %27 = vector.broadcast %cst_19 : f32 to vector<2x32xf32>
    %28 = arith.divf %26, %27 : vector<2x32xf32>
    %c0_20 = arith.constant 0 : index
    %c0_21 = arith.constant 0 : index
    %29 = vector.load %arg4[%c0_20, %c0_21] : memref<1x32xf32, #tpu.memory_space<vmem>>, vector<1x32xf32>
    %30 = vector.broadcast %29 : vector<1x32xf32> to vector<2x32xf32>
    %31 = arith.addf %28, %30 : vector<2x32xf32>
    %cst_22 = arith.constant dense<0.000000e+00> : vector<2x32xf32>
    %32 = vector.multi_reduction <add>, %16, %cst_22 [1] : vector<2x16x32xf32> to vector<2x32xf32>
    %cst_23 = arith.constant 1.600000e+01 : f32
    %33 = vector.broadcast %cst_23 : f32 to vector<2x32xf32>
    %34 = arith.divf %32, %33 : vector<2x32xf32>
    %c0_24 = arith.constant 0 : index
    %c0_25 = arith.constant 0 : index
    %35 = vector.load %arg5[%c0_24, %c0_25] : memref<1x32xf32, #tpu.memory_space<vmem>>, vector<1x32xf32>
    %36 = vector.broadcast %35 : vector<1x32xf32> to vector<2x32xf32>
    %37 = arith.addf %34, %36 : vector<2x32xf32>
    %c0_26 = arith.constant 0 : index
    %c0_27 = arith.constant 0 : index
    %38 = vector.load %arg12[%c0_26, %c0_27] : memref<32x128xf32, #tpu.memory_space<vmem>>, vector<32x128xf32>
    %39 = arith.mulf %31, %25 : vector<2x32xf32>
    %cst_28 = arith.constant dense<0.000000e+00> : vector<2x128xf32>
    %40 = tpu.matmul %39, %38, %cst_28 {dimension_numbers = #tpu.dot_dimension_numbers<[1], [0], [0], [1], [0, 0, 1, 1], [], []>} : vector<2x32xf32>, vector<32x128xf32>, vector<2x128xf32> -> vector<2x128xf32>
    %41 = vector.shape_cast %25 : vector<2x32xf32> to vector<2x1x32xf32>
    %42 = vector.broadcast %41 : vector<2x1x32xf32> to vector<2x16x32xf32>
    %43 = arith.mulf %9, %42 : vector<2x16x32xf32>
    %44 = vector.shape_cast %43 : vector<2x16x32xf32> to vector<32x32xf32>
    %cst_29 = arith.constant dense<0.000000e+00> : vector<32x128xf32>
    %45 = tpu.matmul %44, %38, %cst_29 {dimension_numbers = #tpu.dot_dimension_numbers<[1], [0], [0], [1], [0, 0, 1, 1], [], []>} : vector<32x32xf32>, vector<32x128xf32>, vector<32x128xf32> -> vector<32x128xf32>
    %46 = vector.shape_cast %45 : vector<32x128xf32> to vector<2x16x128xf32>
    %cst_30 = arith.constant dense<0xFF800000> : vector<2x128xf32>
    %47 = vector.multi_reduction <maximumf>, %46, %cst_30 [1] : vector<2x16x128xf32> to vector<2x128xf32>
    %48 = arith.maximumf %40, %47 : vector<2x128xf32>
    %49 = arith.subf %40, %48 : vector<2x128xf32>
    %50 = math.exp %49 : vector<2x128xf32>
    %51 = vector.shape_cast %48 : vector<2x128xf32> to vector<2x1x128xf32>
    %52 = vector.broadcast %51 : vector<2x1x128xf32> to vector<2x16x128xf32>
    %53 = arith.subf %46, %52 : vector<2x16x128xf32>
    %54 = math.exp %53 : vector<2x16x128xf32>
    %cst_31 = arith.constant dense<0.000000e+00> : vector<2x128xf32>
    %55 = vector.multi_reduction <add>, %54, %cst_31 [1] : vector<2x16x128xf32> to vector<2x128xf32>
    %56 = arith.addf %50, %55 : vector<2x128xf32>
    %57 = tpu.reciprocal %56 {approx = true} : vector<2x128xf32> -> vector<2x128xf32>
    %58 = arith.mulf %50, %57 : vector<2x128xf32>
    %59 = vector.shape_cast %57 : vector<2x128xf32> to vector<2x1x128xf32>
    %60 = vector.broadcast %59 : vector<2x1x128xf32> to vector<2x16x128xf32>
    %61 = arith.mulf %54, %60 : vector<2x16x128xf32>
    %c0_32 = arith.constant 0 : index
    %c0_33 = arith.constant 0 : index
    %62 = vector.load %arg13[%c0_32, %c0_33] : memref<128x32xf32, #tpu.memory_space<vmem>>, vector<128x32xf32>
    %cst_34 = arith.constant dense<0.000000e+00> : vector<2x32xf32>
    %63 = tpu.matmul %58, %62, %cst_34 {dimension_numbers = #tpu.dot_dimension_numbers<[1], [0], [0], [1], [0, 0, 1, 1], [], []>} : vector<2x128xf32>, vector<128x32xf32>, vector<2x32xf32> -> vector<2x32xf32>
    %64 = vector.shape_cast %61 : vector<2x16x128xf32> to vector<32x128xf32>
    %cst_35 = arith.constant dense<0.000000e+00> : vector<32x32xf32>
    %65 = tpu.matmul %64, %62, %cst_35 {dimension_numbers = #tpu.dot_dimension_numbers<[1], [0], [0], [1], [0, 0, 1, 1], [], []>} : vector<32x128xf32>, vector<128x32xf32>, vector<32x32xf32> -> vector<32x32xf32>
    %66 = vector.shape_cast %65 : vector<32x32xf32> to vector<2x16x32xf32>
    %67 = arith.mulf %63, %37 : vector<2x32xf32>
    %68 = arith.mulf %66, %16 : vector<2x16x32xf32>
    %cst_36 = arith.constant dense<0.000000e+00> : vector<2x32xf32>
    %69 = vector.multi_reduction <add>, %68, %cst_36 [1] : vector<2x16x32xf32> to vector<2x32xf32>
    %70 = arith.addf %67, %69 : vector<2x32xf32>
    %71 = arith.truncf %70 : vector<2x32xf32> to vector<2x32xbf16>
    %c0_37 = arith.constant 0 : index
    %c0_38 = arith.constant 0 : index
    %72 = vector.load %arg10[%c0_37, %c0_38] : memref<32x16xbf16, #tpu.memory_space<vmem>>, vector<32x16xbf16>
    %cst_39 = arith.constant dense<0.000000e+00> : vector<2x16xf32>
    %73 = tpu.matmul %71, %72, %cst_39 {dimension_numbers = #tpu.dot_dimension_numbers<[1], [0], [0], [1], [0, 0, 1, 1], [], []>} : vector<2x32xbf16>, vector<32x16xbf16>, vector<2x16xf32> -> vector<2x16xf32>
    %c0_40 = arith.constant 0 : index
    %c0_41 = arith.constant 0 : index
    %74 = vector.load %arg11[%c0_40, %c0_41] : memref<1x16xf32, #tpu.memory_space<vmem>>, vector<1x16xf32>
    %75 = vector.broadcast %74 : vector<1x16xf32> to vector<2x16xf32>
    %76 = arith.addf %73, %75 : vector<2x16xf32>
    %c0_42 = arith.constant 0 : index
    %c0_43 = arith.constant 0 : index
    %77 = vector.load %arg14[%c0_42, %c0_43] : memref<2x16xf32, #tpu.memory_space<vmem>>, vector<2x16xf32>
    tpu.vector_store %arg14[%c0_42, %c0_43], %76 {strides = array<i32>} : memref<2x16xf32, #tpu.memory_space<vmem>>, vector<2x16xf32>,
    return
  }
  func.func @transform_0(%arg0: i32) -> (i32, i32, i32) {
    %c0_i32 = arith.constant 0 : i32
    %c0_i32_0 = arith.constant 0 : i32
    %c0_i32_1 = arith.constant 0 : i32
    return %arg0, %c0_i32, %c0_i32_0 : i32, i32, i32
  }
  func.func @transform_1(%arg0: i32) -> (i32, i32) {
    %c0_i32 = arith.constant 0 : i32
    %c0_i32_0 = arith.constant 0 : i32
    %c0_i32_1 = arith.constant 0 : i32
    return %c0_i32, %c0_i32_0 : i32, i32
  }
  func.func @transform_2(%arg0: i32) -> (i32, i32) {
    %c0_i32 = arith.constant 0 : i32
    %c0_i32_0 = arith.constant 0 : i32
    %c0_i32_1 = arith.constant 0 : i32
    return %c0_i32, %c0_i32_0 : i32, i32
  }
  func.func @transform_3(%arg0: i32) -> (i32, i32) {
    %c0_i32 = arith.constant 0 : i32
    %c0_i32_0 = arith.constant 0 : i32
    %c0_i32_1 = arith.constant 0 : i32
    return %c0_i32, %c0_i32_0 : i32, i32
  }
  func.func @transform_4(%arg0: i32) -> (i32, i32) {
    %c0_i32 = arith.constant 0 : i32
    %c0_i32_0 = arith.constant 0 : i32
    %c0_i32_1 = arith.constant 0 : i32
    return %c0_i32, %c0_i32_0 : i32, i32
  }
  func.func @transform_5(%arg0: i32) -> (i32, i32) {
    %c0_i32 = arith.constant 0 : i32
    %c0_i32_0 = arith.constant 0 : i32
    %c0_i32_1 = arith.constant 0 : i32
    return %c0_i32, %c0_i32_0 : i32, i32
  }
  func.func @transform_6(%arg0: i32) -> (i32, i32) {
    %c0_i32 = arith.constant 0 : i32
    %c0_i32_0 = arith.constant 0 : i32
    %c0_i32_1 = arith.constant 0 : i32
    return %c0_i32, %c0_i32_0 : i32, i32
  }
  func.func @transform_7(%arg0: i32) -> (i32, i32) {
    %c0_i32 = arith.constant 0 : i32
    %c0_i32_0 = arith.constant 0 : i32
    %c0_i32_1 = arith.constant 0 : i32
    return %c0_i32, %c0_i32_0 : i32, i32
  }
  func.func @transform_8(%arg0: i32) -> (i32, i32) {
    %c0_i32 = arith.constant 0 : i32
    %c0_i32_0 = arith.constant 0 : i32
    %c0_i32_1 = arith.constant 0 : i32
    return %c0_i32, %c0_i32_0 : i32, i32
  }
  func.func @transform_9(%arg0: i32) -> (i32, i32) {
    %c0_i32 = arith.constant 0 : i32
    %c0_i32_0 = arith.constant 0 : i32
    %c0_i32_1 = arith.constant 0 : i32
    return %c0_i32, %c0_i32_0 : i32, i32
  }
  func.func @transform_10(%arg0: i32) -> (i32, i32) {
    %c0_i32 = arith.constant 0 : i32
    %c0_i32_0 = arith.constant 0 : i32
    %c0_i32_1 = arith.constant 0 : i32
    return %c0_i32, %c0_i32_0 : i32, i32
  }
  func.func @transform_11(%arg0: i32) -> (i32, i32) {
    %c0_i32 = arith.constant 0 : i32
    %c0_i32_0 = arith.constant 0 : i32
    %c0_i32_1 = arith.constant 0 : i32
    return %c0_i32, %c0_i32_0 : i32, i32
  }
  func.func @transform_12(%arg0: i32) -> (i32, i32) {
    %c0_i32 = arith.constant 0 : i32
    %c0_i32_0 = arith.constant 0 : i32
    %c0_i32_1 = arith.constant 0 : i32
    return %c0_i32, %c0_i32_0 : i32, i32
  }
  func.func @transform_13(%arg0: i32) -> (i32, i32) {
    %c0_i32 = arith.constant 0 : i32
    %c0_i32_0 = arith.constant 0 : i32
    return %arg0, %c0_i32 : i32, i32
  }
}

module attributes {stable_mosaic.version = 11 : i64} {
  func.func @_attn_pool_kernel(%arg0: i32, %arg1: memref<2x16x32xf32, #tpu.memory_space<vmem>>, %arg2: memref<16x32xf32, #tpu.memory_space<vmem>>, %arg3: memref<16x32xf32, #tpu.memory_space<vmem>>, %arg4: memref<1x32xf32, #tpu.memory_space<vmem>>, %arg5: memref<1x32xf32, #tpu.memory_space<vmem>>, %arg6: memref<32x32xbf16, #tpu.memory_space<vmem>>, %arg7: memref<1x32xf32, #tpu.memory_space<vmem>>, %arg8: memref<32x32xbf16, #tpu.memory_space<vmem>>, %arg9: memref<32x32xbf16, #tpu.memory_space<vmem>>, %arg10: memref<32x16xbf16, #tpu.memory_space<vmem>>, %arg11: memref<1x16xf32, #tpu.memory_space<vmem>>, %arg12: memref<32x128xf32, #tpu.memory_space<vmem>>, %arg13: memref<128x32xf32, #tpu.memory_space<vmem>>, %arg14: memref<2x16xf32, #tpu.memory_space<vmem>>) attributes {dimension_semantics = [#tpu.dimension_semantics<parallel>], iteration_bounds = array<i64: 1>, scalar_prefetch = 0 : i64, scratch_operands = 0 : i64, tpu.core_type = #tpu.core_type<tc>, window_params = [{transform_indices = @transform_0, window_bounds = array<i64: 2, 16, 32>}, {pipeline_mode = #tpu.pipeline_mode<synchronous>, transform_indices = @transform_1, window_bounds = array<i64: 16, 32>}, {pipeline_mode = #tpu.pipeline_mode<synchronous>, transform_indices = @transform_2, window_bounds = array<i64: 16, 32>}, {pipeline_mode = #tpu.pipeline_mode<synchronous>, transform_indices = @transform_3, window_bounds = array<i64: 1, 32>}, {pipeline_mode = #tpu.pipeline_mode<synchronous>, transform_indices = @transform_4, window_bounds = array<i64: 1, 32>}, {pipeline_mode = #tpu.pipeline_mode<synchronous>, transform_indices = @transform_5, window_bounds = array<i64: 32, 32>}, {pipeline_mode = #tpu.pipeline_mode<synchronous>, transform_indices = @transform_6, window_bounds = array<i64: 1, 32>}, {pipeline_mode = #tpu.pipeline_mode<synchronous>, transform_indices = @transform_7, window_bounds = array<i64: 32, 32>}, {pipeline_mode = #tpu.pipeline_mode<synchronous>, transform_indices = @transform_8, window_bounds = array<i64: 32, 32>}, {pipeline_mode = #tpu.pipeline_mode<synchronous>, transform_indices = @transform_9, window_bounds = array<i64: 32, 16>}, {pipeline_mode = #tpu.pipeline_mode<synchronous>, transform_indices = @transform_10, window_bounds = array<i64: 1, 16>}, {pipeline_mode = #tpu.pipeline_mode<synchronous>, transform_indices = @transform_11, window_bounds = array<i64: 32, 128>}, {pipeline_mode = #tpu.pipeline_mode<synchronous>, transform_indices = @transform_12, window_bounds = array<i64: 128, 32>}, {transform_indices = @transform_13, window_bounds = array<i64: 2, 16>}]} {
    %c0 = arith.constant 0 : index
    %c0_0 = arith.constant 0 : index
    %c0_1 = arith.constant 0 : index
    %0 = vector.load %arg1[%c0, %c0_0, %c0_1] : memref<2x16x32xf32, #tpu.memory_space<vmem>>, vector<2x16x32xf32>
    %1 = arith.truncf %0 : vector<2x16x32xf32> to vector<2x16x32xbf16>
    %2 = vector.shape_cast %1 : vector<2x16x32xbf16> to vector<32x32xbf16>
    %c0_2 = arith.constant 0 : index
    %c0_3 = arith.constant 0 : index
    %3 = vector.load %arg8[%c0_2, %c0_3] : memref<32x32xbf16, #tpu.memory_space<vmem>>, vector<32x32xbf16>
    %cst = arith.constant dense<0.000000e+00> : vector<32x32xf32>
    %4 = tpu.matmul %2, %3, %cst {dimension_numbers = #tpu.dot_dimension_numbers<[1], [0], [0], [1], [0, 0, 1, 1], [], []>} : vector<32x32xbf16>, vector<32x32xbf16>, vector<32x32xf32> -> vector<32x32xf32>
    %5 = vector.shape_cast %4 : vector<32x32xf32> to vector<2x16x32xf32>
    %c0_4 = arith.constant 0 : index
    %c0_5 = arith.constant 0 : index
    %6 = vector.load %arg2[%c0_4, %c0_5] : memref<16x32xf32, #tpu.memory_space<vmem>>, vector<16x32xf32>
    %7 = vector.shape_cast %6 : vector<16x32xf32> to vector<1x16x32xf32>
    %8 = vector.broadcast %7 : vector<1x16x32xf32> to vector<2x16x32xf32>
    %9 = arith.addf %5, %8 : vector<2x16x32xf32>
    %c0_6 = arith.constant 0 : index
    %c0_7 = arith.constant 0 : index
    %10 = vector.load %arg9[%c0_6, %c0_7] : memref<32x32xbf16, #tpu.memory_space<vmem>>, vector<32x32xbf16>
    %cst_8 = arith.constant dense<0.000000e+00> : vector<32x32xf32>
    %11 = tpu.matmul %2, %10, %cst_8 {dimension_numbers = #tpu.dot_dimension_numbers<[1], [0], [0], [1], [0, 0, 1, 1], [], []>} : vector<32x32xbf16>, vector<32x32xbf16>, vector<32x32xf32> -> vector<32x32xf32>
    %12 = vector.shape_cast %11 : vector<32x32xf32> to vector<2x16x32xf32>
    %c0_9 = arith.constant 0 : index
    %c0_10 = arith.constant 0 : index
    %13 = vector.load %arg3[%c0_9, %c0_10] : memref<16x32xf32, #tpu.memory_space<vmem>>, vector<16x32xf32>
    %14 = vector.shape_cast %13 : vector<16x32xf32> to vector<1x16x32xf32>
    %15 = vector.broadcast %14 : vector<1x16x32xf32> to vector<2x16x32xf32>
    %16 = arith.addf %12, %15 : vector<2x16x32xf32>
    %cst_11 = arith.constant dense<0.000000e+00> : vector<2x32xf32>
    %17 = vector.multi_reduction <add>, %0, %cst_11 [1] : vector<2x16x32xf32> to vector<2x32xf32>
    %cst_12 = arith.constant 1.600000e+01 : f32
    %18 = vector.broadcast %cst_12 : f32 to vector<2x32xf32>
    %19 = arith.divf %17, %18 : vector<2x32xf32>
    %20 = arith.truncf %19 : vector<2x32xf32> to vector<2x32xbf16>
    %c0_13 = arith.constant 0 : index
    %c0_14 = arith.constant 0 : index
    %21 = vector.load %arg6[%c0_13, %c0_14] : memref<32x32xbf16, #tpu.memory_space<vmem>>, vector<32x32xbf16>
    %cst_15 = arith.constant dense<0.000000e+00> : vector<2x32xf32>
    %22 = tpu.matmul %20, %21, %cst_15 {dimension_numbers = #tpu.dot_dimension_numbers<[1], [0], [0], [1], [0, 0, 1, 1], [], []>} : vector<2x32xbf16>, vector<32x32xbf16>, vector<2x32xf32> -> vector<2x32xf32>
    %c0_16 = arith.constant 0 : index
    %c0_17 = arith.constant 0 : index
    %23 = vector.load %arg7[%c0_16, %c0_17] : memref<1x32xf32, #tpu.memory_space<vmem>>, vector<1x32xf32>
    %24 = vector.broadcast %23 : vector<1x32xf32> to vector<2x32xf32>
    %25 = arith.addf %22, %24 : vector<2x32xf32>
    %cst_18 = arith.constant dense<0.000000e+00> : vector<2x32xf32>
    %26 = vector.multi_reduction <add>, %9, %cst_18 [1] : vector<2x16x32xf32> to vector<2x32xf32>
    %cst_19 = arith.constant 1.600000e+01 : f32
    %27 = vector.broadcast %cst_19 : f32 to vector<2x32xf32>
    %28 = arith.divf %26, %27 : vector<2x32xf32>
    %c0_20 = arith.constant 0 : index
    %c0_21 = arith.constant 0 : index
    %29 = vector.load %arg4[%c0_20, %c0_21] : memref<1x32xf32, #tpu.memory_space<vmem>>, vector<1x32xf32>
    %30 = vector.broadcast %29 : vector<1x32xf32> to vector<2x32xf32>
    %31 = arith.addf %28, %30 : vector<2x32xf32>
    %cst_22 = arith.constant dense<0.000000e+00> : vector<2x32xf32>
    %32 = vector.multi_reduction <add>, %16, %cst_22 [1] : vector<2x16x32xf32> to vector<2x32xf32>
    %cst_23 = arith.constant 1.600000e+01 : f32
    %33 = vector.broadcast %cst_23 : f32 to vector<2x32xf32>
    %34 = arith.divf %32, %33 : vector<2x32xf32>
    %c0_24 = arith.constant 0 : index
    %c0_25 = arith.constant 0 : index
    %35 = vector.load %arg5[%c0_24, %c0_25] : memref<1x32xf32, #tpu.memory_space<vmem>>, vector<1x32xf32>
    %36 = vector.broadcast %35 : vector<1x32xf32> to vector<2x32xf32>
    %37 = arith.addf %34, %36 : vector<2x32xf32>
    %c0_26 = arith.constant 0 : index
    %c0_27 = arith.constant 0 : index
    %38 = vector.load %arg12[%c0_26, %c0_27] : memref<32x128xf32, #tpu.memory_space<vmem>>, vector<32x128xf32>
    %39 = arith.mulf %31, %25 : vector<2x32xf32>
    %cst_28 = arith.constant dense<0.000000e+00> : vector<2x128xf32>
    %40 = tpu.matmul %39, %38, %cst_28 {dimension_numbers = #tpu.dot_dimension_numbers<[1], [0], [0], [1], [0, 0, 1, 1], [], []>} : vector<2x32xf32>, vector<32x128xf32>, vector<2x128xf32> -> vector<2x128xf32>
    %41 = vector.shape_cast %25 : vector<2x32xf32> to vector<2x1x32xf32>
    %42 = vector.broadcast %41 : vector<2x1x32xf32> to vector<2x16x32xf32>
    %43 = arith.mulf %9, %42 : vector<2x16x32xf32>
    %44 = vector.shape_cast %43 : vector<2x16x32xf32> to vector<32x32xf32>
    %cst_29 = arith.constant dense<0.000000e+00> : vector<32x128xf32>
    %45 = tpu.matmul %44, %38, %cst_29 {dimension_numbers = #tpu.dot_dimension_numbers<[1], [0], [0], [1], [0, 0, 1, 1], [], []>} : vector<32x32xf32>, vector<32x128xf32>, vector<32x128xf32> -> vector<32x128xf32>
    %46 = vector.shape_cast %45 : vector<32x128xf32> to vector<2x16x128xf32>
    %cst_30 = arith.constant dense<0xFF800000> : vector<2x128xf32>
    %47 = vector.multi_reduction <maximumf>, %46, %cst_30 [1] : vector<2x16x128xf32> to vector<2x128xf32>
    %48 = arith.maximumf %40, %47 : vector<2x128xf32>
    %49 = arith.subf %40, %48 : vector<2x128xf32>
    %50 = math.exp %49 : vector<2x128xf32>
    %51 = vector.shape_cast %48 : vector<2x128xf32> to vector<2x1x128xf32>
    %52 = vector.broadcast %51 : vector<2x1x128xf32> to vector<2x16x128xf32>
    %53 = arith.subf %46, %52 : vector<2x16x128xf32>
    %54 = math.exp %53 : vector<2x16x128xf32>
    %cst_31 = arith.constant dense<0.000000e+00> : vector<2x128xf32>
    %55 = vector.multi_reduction <add>, %54, %cst_31 [1] : vector<2x16x128xf32> to vector<2x128xf32>
    %56 = arith.addf %50, %55 : vector<2x128xf32>
    %57 = tpu.reciprocal %56 {approx = true} : vector<2x128xf32> -> vector<2x128xf32>
    %58 = arith.mulf %50, %57 : vector<2x128xf32>
    %59 = vector.shape_cast %57 : vector<2x128xf32> to vector<2x1x128xf32>
    %60 = vector.broadcast %59 : vector<2x1x128xf32> to vector<2x16x128xf32>
    %61 = arith.mulf %54, %60 : vector<2x16x128xf32>
    %c0_32 = arith.constant 0 : index
    %c0_33 = arith.constant 0 : index
    %62 = vector.load %arg13[%c0_32, %c0_33] : memref<128x32xf32, #tpu.memory_space<vmem>>, vector<128x32xf32>
    %cst_34 = arith.constant dense<0.000000e+00> : vector<2x32xf32>
    %63 = tpu.matmul %58, %62, %cst_34 {dimension_numbers = #tpu.dot_dimension_numbers<[1], [0], [0], [1], [0, 0, 1, 1], [], []>} : vector<2x128xf32>, vector<128x32xf32>, vector<2x32xf32> -> vector<2x32xf32>
    %64 = vector.shape_cast %61 : vector<2x16x128xf32> to vector<32x128xf32>
    %cst_35 = arith.constant dense<0.000000e+00> : vector<32x32xf32>
    %65 = tpu.matmul %64, %62, %cst_35 {dimension_numbers = #tpu.dot_dimension_numbers<[1], [0], [0], [1], [0, 0, 1, 1], [], []>} : vector<32x128xf32>, vector<128x32xf32>, vector<32x32xf32> -> vector<32x32xf32>
    %66 = vector.shape_cast %65 : vector<32x32xf32> to vector<2x16x32xf32>
    %67 = arith.mulf %63, %37 : vector<2x32xf32>
    %68 = arith.mulf %66, %16 : vector<2x16x32xf32>
    %cst_36 = arith.constant dense<0.000000e+00> : vector<2x32xf32>
    %69 = vector.multi_reduction <add>, %68, %cst_36 [1] : vector<2x16x32xf32> to vector<2x32xf32>
    %70 = arith.addf %67, %69 : vector<2x32xf32>
    %71 = arith.truncf %70 : vector<2x32xf32> to vector<2x32xbf16>
    %c0_37 = arith.constant 0 : index
    %c0_38 = arith.constant 0 : index
    %72 = vector.load %arg10[%c0_37, %c0_38] : memref<32x16xbf16, #tpu.memory_space<vmem>>, vector<32x16xbf16>
    %cst_39 = arith.constant dense<0.000000e+00> : vector<2x16xf32>
    %73 = tpu.matmul %71, %72, %cst_39 {dimension_numbers = #tpu.dot_dimension_numbers<[1], [0], [0], [1], [0, 0, 1, 1], [], []>} : vector<2x32xbf16>, vector<32x16xbf16>, vector<2x16xf32> -> vector<2x16xf32>
    %c0_40 = arith.constant 0 : index
    %c0_41 = arith.constant 0 : index
    %74 = vector.load %arg11[%c0_40, %c0_41] : memref<1x16xf32, #tpu.memory_space<vmem>>, vector<1x16xf32>
    %75 = vector.broadcast %74 : vector<1x16xf32> to vector<2x16xf32>
    %76 = arith.addf %73, %75 : vector<2x16xf32>
    %c0_42 = arith.constant 0 : index
    %c0_43 = arith.constant 0 : index
    %77 = vector.load %arg14[%c0_42, %c0_43] : memref<2x16xf32, #tpu.memory_space<vmem>>, vector<2x16xf32>
    tpu.vector_store %arg14[%c0_42, %c0_43], %76 {strides = array<i32>} : memref<2x16xf32, #tpu.memory_space<vmem>>, vector<2x16xf32>,
    return
  }
  func.func @transform_0(%arg0: i32) -> (i32, i32, i32) {
    %c0_i32 = arith.constant 0 : i32
    %c0_i32_0 = arith.constant 0 : i32
    %c0_i32_1 = arith.constant 0 : i32
    return %arg0, %c0_i32, %c0_i32_0 : i32, i32, i32
  }
  func.func @transform_1(%arg0: i32) -> (i32, i32) {
    %c0_i32 = arith.constant 0 : i32
    %c0_i32_0 = arith.constant 0 : i32
    %c0_i32_1 = arith.constant 0 : i32
    return %c0_i32, %c0_i32_0 : i32, i32
  }
  func.func @transform_2(%arg0: i32) -> (i32, i32) {
    %c0_i32 = arith.constant 0 : i32
    %c0_i32_0 = arith.constant 0 : i32
    %c0_i32_1 = arith.constant 0 : i32
    return %c0_i32, %c0_i32_0 : i32, i32
  }
  func.func @transform_3(%arg0: i32) -> (i32, i32) {
    %c0_i32 = arith.constant 0 : i32
    %c0_i32_0 = arith.constant 0 : i32
    %c0_i32_1 = arith.constant 0 : i32
    return %c0_i32, %c0_i32_0 : i32, i32
  }
  func.func @transform_4(%arg0: i32) -> (i32, i32) {
    %c0_i32 = arith.constant 0 : i32
    %c0_i32_0 = arith.constant 0 : i32
    %c0_i32_1 = arith.constant 0 : i32
    return %c0_i32, %c0_i32_0 : i32, i32
  }
  func.func @transform_5(%arg0: i32) -> (i32, i32) {
    %c0_i32 = arith.constant 0 : i32
    %c0_i32_0 = arith.constant 0 : i32
    %c0_i32_1 = arith.constant 0 : i32
    return %c0_i32, %c0_i32_0 : i32, i32
  }
  func.func @transform_6(%arg0: i32) -> (i32, i32) {
    %c0_i32 = arith.constant 0 : i32
    %c0_i32_0 = arith.constant 0 : i32
    %c0_i32_1 = arith.constant 0 : i32
    return %c0_i32, %c0_i32_0 : i32, i32
  }
  func.func @transform_7(%arg0: i32) -> (i32, i32) {
    %c0_i32 = arith.constant 0 : i32
    %c0_i32_0 = arith.constant 0 : i32
    %c0_i32_1 = arith.constant 0 : i32
    return %c0_i32, %c0_i32_0 : i32, i32
  }
  func.func @transform_8(%arg0: i32) -> (i32, i32) {
    %c0_i32 = arith.constant 0 : i32
    %c0_i32_0 = arith.constant 0 : i32
    %c0_i32_1 = arith.constant 0 : i32
    return %c0_i32, %c0_i32_0 : i32, i32
  }
  func.func @transform_9(%arg0: i32) -> (i32, i32) {
    %c0_i32 = arith.constant 0 : i32
    %c0_i32_0 = arith.constant 0 : i32
    %c0_i32_1 = arith.constant 0 : i32
    return %c0_i32, %c0_i32_0 : i32, i32
  }
  func.func @transform_10(%arg0: i32) -> (i32, i32) {
    %c0_i32 = arith.constant 0 : i32
    %c0_i32_0 = arith.constant 0 : i32
    %c0_i32_1 = arith.constant 0 : i32
    return %c0_i32, %c0_i32_0 : i32, i32
  }
  func.func @transform_11(%arg0: i32) -> (i32, i32) {
    %c0_i32 = arith.constant 0 : i32
    %c0_i32_0 = arith.constant 0 : i32
    %c0_i32_1 = arith.constant 0 : i32
    return %c0_i32, %c0_i32_0 : i32, i32
  }
  func.func @transform_12(%arg0: i32) -> (i32, i32) {
    %c0_i32 = arith.constant 0 : i32
    %c0_i32_0 = arith.constant 0 : i32
    %c0_i32_1 = arith.constant 0 : i32
    return %c0_i32, %c0_i32_0 : i32, i32
  }
  func.func @transform_13(%arg0: i32) -> (i32, i32) {
    %c0_i32 = arith.constant 0 : i32
    %c0_i32_0 = arith.constant 0 : i32
    return %arg0, %c0_i32 : i32, i32
  }
}

</mosaic_0001>

<llo_original>
// kernel: tpu_custom_call.1
$region0: #{tpu_custom_call.1}
  #allocation0 [shape = 'u32[]', space=smem, size = 0x4, offset = 0x4, fixed_abs, tag = 'smem constant byte address 0x4 - core index']
  #allocation1 [shape = 'u32[72,128]{1,0:T(1,128)}', space=vmem, size = 0x9000, scoped, tag = 'internal scratch']
  %s0 = inlined_call_operand.vmem [shape: f32[2,16,32], index: 0, kind: input, shape index: {}]
  %s1 = inlined_call_operand.vmem [shape: f32[16,32], index: 1, kind: input, shape index: {}]
  %s2 = inlined_call_operand.vmem [shape: f32[16,32], index: 2, kind: input, shape index: {}]
  %s3 = inlined_call_operand.vmem [shape: f32[1,32], index: 3, kind: input, shape index: {}]
  %s4 = inlined_call_operand.vmem [shape: f32[1,32], index: 4, kind: input, shape index: {}]
  %s5 = inlined_call_operand.vmem [shape: bf16[32,32], index: 5, kind: input, shape index: {}]
  %s6 = inlined_call_operand.vmem [shape: f32[1,32], index: 6, kind: input, shape index: {}]
  %s7 = inlined_call_operand.vmem [shape: bf16[32,32], index: 7, kind: input, shape index: {}]
  %s8 = inlined_call_operand.vmem [shape: bf16[32,32], index: 8, kind: input, shape index: {}]
  %s9 = inlined_call_operand.vmem [shape: bf16[32,16], index: 9, kind: input, shape index: {}]
  %s10 = inlined_call_operand.vmem [shape: f32[1,16], index: 10, kind: input, shape index: {}]
  %s11 = inlined_call_operand.vmem [shape: f32[32,128], index: 11, kind: input, shape index: {}]
  %s12 = inlined_call_operand.vmem [shape: f32[128,32], index: 12, kind: input, shape index: {}]
  %s13 = inlined_call_operand.hbm [shape: f32[2,16], index: 13, kind: output, shape index: {}]
  %s14 = sld [smem:[#allocation0]]
  $region62: #{tpu_custom_call.1} parent=0
    _
  %s16 = ssub.s32 1, %s14
  %s17 = scalar_select 0, %s16, %s14
  $region1: #{tpu_custom_call.1} parent=0
    #allocation2 [shape = 'u8[1024]{0}', space=vmem, size = 0x400, scoped, tag = 'output window, operand 0, single buffered']
    #allocation3 [shape = 's32[1]{0}', space=sflag, size = 0x4, scoped, tag = 'scoped memory for tpu_custom_call.1']
    %18 = vsyncpa [#allocation3], 0
    // Predicated region
    $region2: #{tpu_custom_call.1} parent=1 // pred_check
      _
    $region3: #{tpu_custom_call.1} parent=1 // pred_check_branch
      %20 = sbr.rel (0) target = $region5
    $region4: #{tpu_custom_call.1} parent=1 // pred_region
      _
    $region5: #{tpu_custom_call.1} parent=1 // pred_fallthru
      _
    // Predicated region
    $region6: #{tpu_custom_call.1} parent=1 // pred_check
      _
    $region7: #{tpu_custom_call.1} parent=1 // pred_check_branch
      %22 = sbr.rel (0) target = $region9
    $region8: #{tpu_custom_call.1} parent=1 // pred_region
      _
    $region9: #{tpu_custom_call.1} parent=1 // pred_fallthru
      _
    // Predicated region
    $region10: #{tpu_custom_call.1} parent=1 // pred_check
      _
    $region11: #{tpu_custom_call.1} parent=1 // pred_check_branch
      %24 = sbr.rel (0) target = $region13
    $region12: #{tpu_custom_call.1} parent=1 // pred_region
      _
    $region13: #{tpu_custom_call.1} parent=1 // pred_fallthru
      _
    // Predicated region
    $region14: #{tpu_custom_call.1} parent=1 // pred_check
      _
    $region15: #{tpu_custom_call.1} parent=1 // pred_check_branch
      %26 = sbr.rel (0) target = $region17
    $region16: #{tpu_custom_call.1} parent=1 // pred_region
      _
    $region17: #{tpu_custom_call.1} parent=1 // pred_fallthru
      _
    // Predicated region
    $region18: #{tpu_custom_call.1} parent=1 // pred_check
      _
    $region19: #{tpu_custom_call.1} parent=1 // pred_check_branch
      %28 = sbr.rel (0) target = $region21
    $region20: #{tpu_custom_call.1} parent=1 // pred_region
      _
    $region21: #{tpu_custom_call.1} parent=1 // pred_fallthru
      _
    // Predicated region
    $region22: #{tpu_custom_call.1} parent=1 // pred_check
      _
    $region23: #{tpu_custom_call.1} parent=1 // pred_check_branch
      %30 = sbr.rel (0) target = $region25
    $region24: #{tpu_custom_call.1} parent=1 // pred_region
      _
    $region25: #{tpu_custom_call.1} parent=1 // pred_fallthru
      _
    // Predicated region
    $region26: #{tpu_custom_call.1} parent=1 // pred_check
      _
    $region27: #{tpu_custom_call.1} parent=1 // pred_check_branch
      %32 = sbr.rel (0) target = $region29
    $region28: #{tpu_custom_call.1} parent=1 // pred_region
      _
    $region29: #{tpu_custom_call.1} parent=1 // pred_fallthru
      _
    // Predicated region
    $region30: #{tpu_custom_call.1} parent=1 // pred_check
      _
    $region31: #{tpu_custom_call.1} parent=1 // pred_check_branch
      %34 = sbr.rel (0) target = $region33
    $region32: #{tpu_custom_call.1} parent=1 // pred_region
      _
    $region33: #{tpu_custom_call.1} parent=1 // pred_fallthru
      _
    // Predicated region
    $region34: #{tpu_custom_call.1} parent=1 // pred_check
      _
    $region35: #{tpu_custom_call.1} parent=1 // pred_check_branch
      %36 = sbr.rel (0) target = $region37
    $region36: #{tpu_custom_call.1} parent=1 // pred_region
      _
    $region37: #{tpu_custom_call.1} parent=1 // pred_fallthru
      _
    // Predicated region
    $region38: #{tpu_custom_call.1} parent=1 // pred_check
      _
    $region39: #{tpu_custom_call.1} parent=1 // pred_check_branch
      %38 = sbr.rel (0) target = $region41
    $region40: #{tpu_custom_call.1} parent=1 // pred_region
      _
    $region41: #{tpu_custom_call.1} parent=1 // pred_fallthru
      _
    // Predicated region
    $region42: #{tpu_custom_call.1} parent=1 // pred_check
      _
    $region43: #{tpu_custom_call.1} parent=1 // pred_check_branch
      %40 = sbr.rel (0) target = $region45
    $region44: #{tpu_custom_call.1} parent=1 // pred_region
      _
    $region45: #{tpu_custom_call.1} parent=1 // pred_fallthru
      _
    // Predicated region
    $region46: #{tpu_custom_call.1} parent=1 // pred_check
      _
    $region47: #{tpu_custom_call.1} parent=1 // pred_check_branch
      %42 = sbr.rel (0) target = $region49
    $region48: #{tpu_custom_call.1} parent=1 // pred_region
      _
    $region49: #{tpu_custom_call.1} parent=1 // pred_fallthru
      _
    // Predicated region
    $region50: #{tpu_custom_call.1} parent=1 // pred_check
      _
    $region51: #{tpu_custom_call.1} parent=1 // pred_check_branch
      %44 = sbr.rel (0) target = $region53
    $region52: #{tpu_custom_call.1} parent=1 // pred_region
      _
    $region53: #{tpu_custom_call.1} parent=1 // pred_fallthru
      _
    %v46 = vld [vmem:[%s0] sm:$0xff]
    %v47 = vld [vmem:[%s0 + $0x8] sm:$0xff]
    %v48 = vld [vmem:[%s0 + $0x10] sm:$0xff]
    %v49 = vld [vmem:[%s0 + $0x18] sm:$0xff]
    %v50 = vpack.c.bf16 %v46, %v46
    %v51 = vpack.c.bf16 %v47, %v47
    %v52 = vpack.c.bf16 %v48, %v48
    %v53 = vpack.c.bf16 %v49, %v49
    %v54 = vld [vmem:[%s7] sm:$0xf]
    %v55 = vld [vmem:[%s7 + $0x4] sm:$0xf]
    %v56 = vld [vmem:[%s7 + $0x8] sm:$0xf]
    %v57 = vld [vmem:[%s7 + $0xc] sm:$0xf]
    %v62 = vunpack.c.l.b16 %v50
    %v63 = vunpack.c.l.b16 %v51
    %v64 = vunpack.c.l.b16 %v52
    %v65 = vunpack.c.l.b16 %v53
    %v66 = vpack.c.b16 %v63, %v62
    %v67 = vpack.c.b16 %v65, %v64
    %v72 = vunpack.c.l.b16 %v54
    %v73 = vunpack.c.l.b16 %v55
    %v74 = vunpack.c.l.b16 %v56
    %v75 = vunpack.c.l.b16 %v57
    %v76 = vpack.c.b16 %v73, %v72
    %v77 = vpack.c.b16 %v75, %v74
    %vm80 = vcmask 261120
    %v82 = vsel %vm80, %v66, 0
    %v85 = vsel %vm80, %v67, 0
    %87 = vmatpush.bf16.msra.mxu0 0
    %88 = vmatpush.bf16.msra.mxu0 0
    %89 = vmatpush.bf16.msra.mxu0 0
    %90 = vmatpush.bf16.msra.mxu0 0
    %91 = vmatpush.bf16.msra.mxu0 0
    %92 = vmatpush.bf16.msra.mxu0 0
    %93 = vmatpush.bf16.msra.mxu0 %v77
    %94 = vmatpush.bf16.msra.mxu0 %v76
    %95 = vmatmul.bf16.gmra.mxu0 %v82
    %v96 = vpop.f32.mrf.mxu0
    %v97 = vadd.f32 0.0, %v96
    %v98 = vpop.f32.mrf.mxu0
    %v99 = vadd.f32 0.0, %v98
    %100 = vmatmul.bf16.gmra.mxu0 %v85
    %v101 = vpop.f32.mrf.mxu0
    %v102 = vadd.f32 0.0, %v101
    %v103 = vpop.f32.mrf.mxu0
    %v104 = vadd.f32 0.0, %v103
    %105 = vdwg.mxu0
    %v106 = vld [vmem:[%s1] sm:$0xff]
    %v107 = vld [vmem:[%s1 + $0x8] sm:$0xff]
    %v108 = vadd.f32 %v97, %v106
    %v109 = vadd.f32 %v99, %v107
    %v110 = vadd.f32 %v102, %v106
    %v111 = vadd.f32 %v104, %v107
    %v112 = vld [vmem:[%s8] sm:$0xf]
    %v113 = vld [vmem:[%s8 + $0x4] sm:$0xf]
    %v114 = vld [vmem:[%s8 + $0x8] sm:$0xf]
    %v115 = vld [vmem:[%s8 + $0xc] sm:$0xf]
    %v120 = vunpack.c.l.b16 %v112
    %v121 = vunpack.c.l.b16 %v113
    %v122 = vunpack.c.l.b16 %v114
    %v123 = vunpack.c.l.b16 %v115
    %v124 = vpack.c.b16 %v121, %v120
    %v125 = vpack.c.b16 %v123, %v122
    %128 = vmatpush.bf16.msra.mxu0 0
    %129 = vmatpush.bf16.msra.mxu0 0
    %130 = vmatpush.bf16.msra.mxu0 0
    %131 = vmatpush.bf16.msra.mxu0 0
    %132 = vmatpush.bf16.msra.mxu0 0
    %133 = vmatpush.bf16.msra.mxu0 0
    %134 = vmatpush.bf16.msra.mxu0 %v125
    %135 = vmatpush.bf16.msra.mxu0 %v124
    %136 = vmatmul.bf16.gmra.mxu0 %v82
    %v137 = vpop.f32.mrf.mxu0
    %v138 = vadd.f32 0.0, %v137
    %v139 = vpop.f32.mrf.mxu0
    %v140 = vadd.f32 0.0, %v139
    %141 = vmatmul.bf16.gmra.mxu0 %v85
    %v142 = vpop.f32.mrf.mxu0
    %v143 = vadd.f32 0.0, %v142
    %v144 = vpop.f32.mrf.mxu0
    %v145 = vadd.f32 0.0, %v144
    %146 = vdwg.mxu0
    %v147 = vld [vmem:[%s2] sm:$0xff]
    %v148 = vld [vmem:[%s2 + $0x8] sm:$0xff]
    %v149 = vadd.f32 %v138, %v147
    %v150 = vadd.f32 %v140, %v148
    %v151 = vadd.f32 %v143, %v147
    %v152 = vadd.f32 %v145, %v148
    %v153 = vsel %vm80, %v46, 0.0
    %v154 = vsel %vm80, %v47, 0.0
    %v155 = vadd.f32 %v153, %v154
    %v156 = vrot.slane %v155, 4
    %v157 = vadd.f32 %v155, %v156
    %v158 = vrot.slane %v157, 2
    %v159 = vadd.f32 %v157, %v158
    %v160 = vrot.slane %v159, 1
    %v161 = vadd.f32 %v159, %v160
    %v162 = vsel %vm80, %v48, 0.0
    %v163 = vsel %vm80, %v49, 0.0
    %v164 = vadd.f32 %v162, %v163
    %v165 = vrot.slane %v164, 4
    %v166 = vadd.f32 %v164, %v165
    %v167 = vrot.slane %v166, 2
    %v168 = vadd.f32 %v166, %v167
    %v169 = vrot.slane %v168, 1
    %v170 = vadd.f32 %v168, %v169
    %v171 = vrcp.pop 16.0
    %v172 = vmul.f32 16.0, %v171
    %v173 = vsub.f32 1.0, %v172
    %v174 = vmul.f32 %v171, %v173
    %v175 = vadd.f32 %v171, %v174
    %vm176 = vweird.f32 %v171
    %v177 = vsel %vm176, %v171, %v175
    %v178 = vmul.f32 %v161, %v177
    %v179 = vmul.f32 %v170, %v177
    %v180 = vpack.c.bf16 %v178, %v178
    %v181 = vpack.c.bf16 %v179, %v179
    %v182 = vld [vmem:[%s5] sm:$0xf]
    %v183 = vld [vmem:[%s5 + $0x4] sm:$0xf]
    %v184 = vld [vmem:[%s5 + $0x8] sm:$0xf]
    %v185 = vld [vmem:[%s5 + $0xc] sm:$0xf]
    %v186 = vld [vmem:[%s6] sm:$0x1]
    %v188 = vperm.slane %v186, 0
    %v192 = vunpack.c.l.b16 %v180
    %v193 = vunpack.c.l.b16 %v181
    %vm194 = vcmask 1041409
    %v195 = vsel %vm194, %v193, %v192
    %v196 = vpack.c.b16 %v195, %v195
    %v201 = vunpack.c.l.b16 %v182
    %v202 = vunpack.c.l.b16 %v183
    %v203 = vunpack.c.l.b16 %v184
    %v204 = vunpack.c.l.b16 %v185
    %v205 = vpack.c.b16 %v202, %v201
    %v206 = vpack.c.b16 %v204, %v203
    %v210 = vsel %vm80, %v196, 0
    %212 = vmatpush.bf16.msra.mxu0 0
    %213 = vmatpush.bf16.msra.mxu0 0
    %214 = vmatpush.bf16.msra.mxu0 0
    %215 = vmatpush.bf16.msra.mxu0 0
    %216 = vmatpush.bf16.msra.mxu0 0
    %217 = vmatpush.bf16.msra.mxu0 0
    %218 = vmatpush.bf16.msra.mxu0 %v206
    %219 = vmatpush.bf16.msra.mxu0 %v205
    %220 = vmatmul.bf16.gmra.mxu0 %v210
    %v221 = vpop.f32.mrf.mxu0
    %v222 = vadd.f32 %v188, %v221
    %v223 = vpop.f32.mrf.mxu0
    %224 = vdwg.mxu0
    %v225 = vsel %vm80, %v108, 0.0
    %v226 = vsel %vm80, %v109, 0.0
    %v227 = vadd.f32 %v225, %v226
    %v228 = vrot.slane %v227, 4
    %v229 = vadd.f32 %v227, %v228
    %v230 = vrot.slane %v229, 2
    %v231 = vadd.f32 %v229, %v230
    %v232 = vrot.slane %v231, 1
    %v233 = vadd.f32 %v231, %v232
    %v234 = vsel %vm80, %v110, 0.0
    %v235 = vsel %vm80, %v111, 0.0
    %v236 = vadd.f32 %v234, %v235
    %v237 = vrot.slane %v236, 4
    %v238 = vadd.f32 %v236, %v237
    %v239 = vrot.slane %v238, 2
    %v240 = vadd.f32 %v238, %v239
    %v241 = vrot.slane %v240, 1
    %v242 = vadd.f32 %v240, %v241
    %v243 = vmul.f32 %v233, %v177
    %v244 = vmul.f32 %v242, %v177
    %v245 = vld [vmem:[%s3] sm:$0x1]
    %v247 = vperm.slane %v245, 0
    %v249 = vadd.f32 %v243, %v247
    %v250 = vadd.f32 %v244, %v247
    %v251 = vsel %vm80, %v149, 0.0
    %v252 = vsel %vm80, %v150, 0.0
    %v253 = vadd.f32 %v251, %v252
    %v254 = vrot.slane %v253, 4
    %v255 = vadd.f32 %v253, %v254
    %v256 = vrot.slane %v255, 2
    %v257 = vadd.f32 %v255, %v256
    %v258 = vrot.slane %v257, 1
    %v259 = vadd.f32 %v257, %v258
    %v260 = vsel %vm80, %v151, 0.0
    %v261 = vsel %vm80, %v152, 0.0
    %v262 = vadd.f32 %v260, %v261
    %v263 = vrot.slane %v262, 4
    %v264 = vadd.f32 %v262, %v263
    %v265 = vrot.slane %v264, 2
    %v266 = vadd.f32 %v264, %v265
    %v267 = vrot.slane %v266, 1
    %v268 = vadd.f32 %v266, %v267
    %v269 = vmul.f32 %v259, %v177
    %v270 = vmul.f32 %v268, %v177
    %v271 = vld [vmem:[%s4] sm:$0x1]
    %v273 = vperm.slane %v271, 0
    %v275 = vadd.f32 %v269, %v273
    %v276 = vadd.f32 %v270, %v273
    %v277 = vld [vmem:[%s11] sm:$0xff]
    %v278 = vld [vmem:[%s11 + $0x8] sm:$0xff]
    %v279 = vld [vmem:[%s11 + $0x10] sm:$0xff]
    %v280 = vld [vmem:[%s11 + $0x18] sm:$0xff]
    %v282 = vrot.slane %v222, 1
    %v285 = vmul.f32 %v249, %v222
    %v286 = vmul.f32 %v250, %v282
    %v289 = vrot.slane %v286, 7
    %v290 = vsel %vm194, %v289, %v285
    %v291 = vsel %vm80, %v290, 0
    %293 = vmatpush.msra.mxu0 0.0
    %294 = vmatpush.msra.mxu0 0.0
    %295 = vmatpush.msra.mxu0 0.0
    %296 = vmatpush.msra.mxu0 0.0
    %297 = vmatpush.msra.mxu0 0.0
    %298 = vmatpush.msra.mxu0 0.0
    %299 = vmatpush.msra.mxu0 0.0
    %300 = vmatpush.msra.mxu0 0.0
    %301 = vmatpush.msra.mxu0 0.0
    %302 = vmatpush.msra.mxu0 0.0
    %303 = vmatpush.msra.mxu0 0.0
    %304 = vmatpush.msra.mxu0 0.0
    %305 = vmatpush.msra.mxu0 %v280
    %306 = vmatpush.msra.mxu0 %v279
    %307 = vmatpush.msra.mxu0 %v278
    %308 = vmatpush.msra.mxu0 %v277
    %309 = vmatmul.f32.gmra.mxu0 %v291
    %v310 = vpop.f32.mrf.mxu0
    %v311 = vadd.f32 0.0, %v310
    %312 = vdwg.mxu0
    %v313 = vperm.slane %v222, 0
    %v314 = vperm.slane %v282, 0
    %v317 = vmul.f32 %v108, %v313
    %v318 = vmul.f32 %v109, %v313
    %v319 = vmul.f32 %v110, %v314
    %v320 = vmul.f32 %v111, %v314
    %v322 = vsel %vm80, %v317, 0
    %v325 = vsel %vm80, %v318, 0
    %v328 = vsel %vm80, %v319, 0
    %v331 = vsel %vm80, %v320, 0
    %333 = vmatpush.msra.mxu0 0.0
    %334 = vmatpush.msra.mxu0 0.0
    %335 = vmatpush.msra.mxu0 0.0
    %336 = vmatpush.msra.mxu0 0.0
    %337 = vmatpush.msra.mxu0 0.0
    %338 = vmatpush.msra.mxu0 0.0
    %339 = vmatpush.msra.mxu0 0.0
    %340 = vmatpush.msra.mxu0 0.0
    %341 = vmatpush.msra.mxu0 0.0
    %342 = vmatpush.msra.mxu0 0.0
    %343 = vmatpush.msra.mxu0 0.0
    %344 = vmatpush.msra.mxu0 0.0
    %345 = vmatpush.msra.mxu0 %v280
    %346 = vmatpush.msra.mxu0 %v279
    %347 = vmatpush.msra.mxu0 %v278
    %348 = vmatpush.msra.mxu0 %v277
    %349 = vmatmul.f32.gmra.mxu0 %v322
    %v350 = vpop.f32.mrf.mxu0
    %v351 = vadd.f32 0.0, %v350
    %352 = vmatmul.f32.gmra.mxu0 %v325
    %v353 = vpop.f32.mrf.mxu0
    %v354 = vadd.f32 0.0, %v353
    %355 = vmatmul.f32.gmra.mxu0 %v328
    %v356 = vpop.f32.mrf.mxu0
    %v357 = vadd.f32 0.0, %v356
    %358 = vmatmul.f32.gmra.mxu0 %v331
    %v359 = vpop.f32.mrf.mxu0
    %v360 = vadd.f32 0.0, %v359
    %361 = vdwg.mxu0
    %v362 = vmax.f32 %v351, %v354
    %v363 = vrot.slane %v362, 4
    %v364 = vmax.f32 %v362, %v363
    %v365 = vrot.slane %v364, 2
    %v366 = vmax.f32 %v364, %v365
    %v367 = vrot.slane %v366, 1
    %v368 = vmax.f32 %v366, %v367
    %v369 = vmax.f32 %v357, %v360
    %v370 = vrot.slane %v369, 4
    %v371 = vmax.f32 %v369, %v370
    %v372 = vrot.slane %v371, 2
    %v373 = vmax.f32 %v371, %v372
    %v374 = vrot.slane %v373, 1
    %v375 = vmax.f32 %v373, %v374
    %v378 = vsel %vm194, %v375, %v368
    %v380 = vmax.f32 %v311, %v378
    %v381 = vsub.f32 %v311, %v380
    %v382 = vmul.f32 %v381, 1.442695
    %v383 = vpow.pop %v382
    %v385 = vrot.slane %v380, 1
    %v386 = vperm.slane %v380, 0
    %v387 = vperm.slane %v385, 0
    %v390 = vsub.f32 %v351, %v386
    %v391 = vsub.f32 %v354, %v386
    %v392 = vsub.f32 %v357, %v387
    %v393 = vsub.f32 %v360, %v387
    %v394 = vmul.f32 %v390, 1.442695
    %v395 = vpow.pop %v394
    %v396 = vmul.f32 %v391, 1.442695
    %v397 = vpow.pop %v396
    %v398 = vmul.f32 %v392, 1.442695
    %v399 = vpow.pop %v398
    %v400 = vmul.f32 %v393, 1.442695
    %v401 = vpow.pop %v400
    %v402 = vadd.f32 %v395, %v397
    %v403 = vrot.slane %v402, 4
    %v404 = vadd.f32 %v402, %v403
    %v405 = vrot.slane %v404, 2
    %v406 = vadd.f32 %v404, %v405
    %v407 = vrot.slane %v406, 1
    %v408 = vadd.f32 %v406, %v407
    %v409 = vadd.f32 %v399, %v401
    %v410 = vrot.slane %v409, 4
    %v411 = vadd.f32 %v409, %v410
    %v412 = vrot.slane %v411, 2
    %v413 = vadd.f32 %v411, %v412
    %v414 = vrot.slane %v413, 1
    %v415 = vadd.f32 %v413, %v414
    %v418 = vsel %vm194, %v415, %v408
    %v420 = vadd.f32 %v383, %v418
    %v421 = vrcp.pop %v420
    %v422 = vmul.f32 %v383, %v421
    %v424 = vrot.slane %v421, 1
    %v425 = vperm.slane %v421, 0
    %v426 = vperm.slane %v424, 0
    %v429 = vmul.f32 %v395, %v425
    %v430 = vmul.f32 %v397, %v425
    %v431 = vmul.f32 %v399, %v426
    %v432 = vmul.f32 %v401, %v426
    %v433 = vld [vmem:[%s12] sm:$0xff]
    %v434 = vld [vmem:[%s12 + $0x8] sm:$0xff]
    %v435 = vld [vmem:[%s12 + $0x10] sm:$0xff]
    %v436 = vld [vmem:[%s12 + $0x18] sm:$0xff]
    %v437 = vld [vmem:[%s12 + $0x20] sm:$0xff]
    %v438 = vld [vmem:[%s12 + $0x28] sm:$0xff]
    %v439 = vld [vmem:[%s12 + $0x30] sm:$0xff]
    %v440 = vld [vmem:[%s12 + $0x38] sm:$0xff]
    %v441 = vld [vmem:[%s12 + $0x40] sm:$0xff]
    %v442 = vld [vmem:[%s12 + $0x48] sm:$0xff]
    %v443 = vld [vmem:[%s12 + $0x50] sm:$0xff]
    %v444 = vld [vmem:[%s12 + $0x58] sm:$0xff]
    %v445 = vld [vmem:[%s12 + $0x60] sm:$0xff]
    %v446 = vld [vmem:[%s12 + $0x68] sm:$0xff]
    %v447 = vld [vmem:[%s12 + $0x70] sm:$0xff]
    %v448 = vld [vmem:[%s12 + $0x78] sm:$0xff]
    %449 = vmatpush.msra.mxu0 %v448
    %450 = vmatpush.msra.mxu0 %v447
    %451 = vmatpush.msra.mxu0 %v446
    %452 = vmatpush.msra.mxu0 %v445
    %453 = vmatpush.msra.mxu0 %v444
    %454 = vmatpush.msra.mxu0 %v443
    %455 = vmatpush.msra.mxu0 %v442
    %456 = vmatpush.msra.mxu0 %v441
    %457 = vmatpush.msra.mxu0 %v440
    %458 = vmatpush.msra.mxu0 %v439
    %459 = vmatpush.msra.mxu0 %v438
    %460 = vmatpush.msra.mxu0 %v437
    %461 = vmatpush.msra.mxu0 %v436
    %462 = vmatpush.msra.mxu0 %v435
    %463 = vmatpush.msra.mxu0 %v434
    %464 = vmatpush.msra.mxu0 %v433
    %465 = vmatmul.f32.gmra.mxu0 %v422
    %v466 = vpop.f32.mrf.mxu0
    %v467 = vadd.f32 0.0, %v466
    %468 = vdwg.mxu0
    %469 = vmatpush.msra.mxu0 %v448
    %470 = vmatpush.msra.mxu0 %v447
    %471 = vmatpush.msra.mxu0 %v446
    %472 = vmatpush.msra.mxu0 %v445
    %473 = vmatpush.msra.mxu0 %v444
    %474 = vmatpush.msra.mxu0 %v443
    %475 = vmatpush.msra.mxu0 %v442
    %476 = vmatpush.msra.mxu0 %v441
    %477 = vmatpush.msra.mxu0 %v440
    %478 = vmatpush.msra.mxu0 %v439
    %479 = vmatpush.msra.mxu0 %v438
    %480 = vmatpush.msra.mxu0 %v437
    %481 = vmatpush.msra.mxu0 %v436
    %482 = vmatpush.msra.mxu0 %v435
    %483 = vmatpush.msra.mxu0 %v434
    %484 = vmatpush.msra.mxu0 %v433
    %485 = vmatmul.f32.gmra.mxu0 %v429
    %v486 = vpop.f32.mrf.mxu0
    %v487 = vadd.f32 0.0, %v486
    %488 = vmatmul.f32.gmra.mxu0 %v430
    %v489 = vpop.f32.mrf.mxu0
    %v490 = vadd.f32 0.0, %v489
    %491 = vmatmul.f32.gmra.mxu0 %v431
    %v492 = vpop.f32.mrf.mxu0
    %v493 = vadd.f32 0.0, %v492
    %494 = vmatmul.f32.gmra.mxu0 %v432
    %v495 = vpop.f32.mrf.mxu0
    %v496 = vadd.f32 0.0, %v495
    %497 = vdwg.mxu0
    %v500 = vrot.slane %v276, 7
    %v501 = vsel %vm194, %v500, %v275
    %v503 = vmul.f32 %v467, %v501
    %v504 = vmul.f32 %v487, %v149
    %v505 = vmul.f32 %v490, %v150
    %v506 = vmul.f32 %v493, %v151
    %v507 = vmul.f32 %v496, %v152
    %v508 = vsel %vm80, %v504, 0.0
    %v509 = vsel %vm80, %v505, 0.0
    %v510 = vadd.f32 %v508, %v509
    %v511 = vrot.slane %v510, 4
    %v512 = vadd.f32 %v510, %v511
    %v513 = vrot.slane %v512, 2
    %v514 = vadd.f32 %v512, %v513
    %v515 = vrot.slane %v514, 1
    %v516 = vadd.f32 %v514, %v515
    %v517 = vsel %vm80, %v506, 0.0
    %v518 = vsel %vm80, %v507, 0.0
    %v519 = vadd.f32 %v517, %v518
    %v520 = vrot.slane %v519, 4
    %v521 = vadd.f32 %v519, %v520
    %v522 = vrot.slane %v521, 2
    %v523 = vadd.f32 %v521, %v522
    %v524 = vrot.slane %v523, 1
    %v525 = vadd.f32 %v523, %v524
    %v528 = vsel %vm194, %v525, %v516
    %v530 = vadd.f32 %v503, %v528
    %v531 = vpack.c.bf16 %v530, %v530
    %v532 = vld [vmem:[%s9] sm:$0xf]
    %v533 = vld [vmem:[%s9 + $0x4] sm:$0xf]
    %v534 = vld [vmem:[%s9 + $0x8] sm:$0xf]
    %v535 = vld [vmem:[%s9 + $0xc] sm:$0xf]
    %v536 = vld [vmem:[%s10] sm:$0x1]
    %v538 = vperm.slane %v536, 0
    %v544 = vunpack.c.l.b16 %v532
    %v545 = vunpack.c.l.b16 %v533
    %v546 = vunpack.c.l.b16 %v534
    %v547 = vunpack.c.l.b16 %v535
    %v548 = vpack.c.b16 %v545, %v544
    %v549 = vpack.c.b16 %v547, %v546
    %v553 = vsel %vm80, %v531, 0
    %555 = vmatpush.bf16.msra.mxu0 0
    %556 = vmatpush.bf16.msra.mxu0 0
    %557 = vmatpush.bf16.msra.mxu0 0
    %558 = vmatpush.bf16.msra.mxu0 0
    %559 = vmatpush.bf16.msra.mxu0 0
    %560 = vmatpush.bf16.msra.mxu0 0
    %561 = vmatpush.bf16.msra.mxu0 %v549
    %562 = vmatpush.bf16.msra.mxu0 %v548
    %563 = vmatmul.bf16.gmra.mxu0 %v553
    %v564 = vpop.f32.mrf.mxu0
    %v565 = vadd.f32 %v538, %v564
    %v566 = vpop.f32.mrf.mxu0
    %567 = vdwg.mxu0
    %vm568 = vcmask 123904
    %569 = vst.msk [vmem:[#allocation2] sm:$0x3] %vm568, %v565
    // Predicated region
    $region54: #{tpu_custom_call.1} parent=1 // pred_check
      _
    $region55: #{tpu_custom_call.1} parent=1 // pred_check_branch
      %571 = sbr.rel (0) target = $region57
    $region56: #{tpu_custom_call.1} parent=1 // pred_region
      %573 = vsyncadd [#allocation3], 0
      %s575 = sshll.u32 [#allocation2], 4
      %s576 = int_to_ptr.vmem [resolvable:$true] %s575
      %s577 = sshll.u32 %s13, 4
      %s578 = int_to_ptr.hbm [resolvable:$true] %s577
      %580 = dma.vmem_to_hbm [thread:$0]  %s576, 32, %s578, [#allocation3]
    $region57: #{tpu_custom_call.1} parent=1 // pred_fallthru
      _
    // Predicated region
    $region58: #{tpu_custom_call.1} parent=1 // pred_check
      _
    $region59: #{tpu_custom_call.1} parent=1 // pred_check_branch
      %582 = sbr.rel (0) target = $region61
    $region60: #{tpu_custom_call.1} parent=1 // pred_region
      %584 = dma.done [#allocation3], 32
    $region61: #{tpu_custom_call.1} parent=1 // pred_fallthru
      _
    %585 = vsyncpa [#allocation3], 1

// kernel: tpu_custom_call.1
$region0: #{tpu_custom_call.1}
  #allocation0 [shape = 'u32[]', space=smem, size = 0x4, offset = 0x4, fixed_abs, tag = 'smem constant byte address 0x4 - core index']
  #allocation1 [shape = 'u32[72,128]{1,0:T(1,128)}', space=vmem, size = 0x9000, scoped, tag = 'internal scratch']
  %s0 = inlined_call_operand.vmem [shape: f32[2,16,32], index: 0, kind: input, shape index: {}]
  %s1 = inlined_call_operand.vmem [shape: f32[16,32], index: 1, kind: input, shape index: {}]
  %s2 = inlined_call_operand.vmem [shape: f32[16,32], index: 2, kind: input, shape index: {}]
  %s3 = inlined_call_operand.vmem [shape: f32[1,32], index: 3, kind: input, shape index: {}]
  %s4 = inlined_call_operand.vmem [shape: f32[1,32], index: 4, kind: input, shape index: {}]
  %s5 = inlined_call_operand.vmem [shape: bf16[32,32], index: 5, kind: input, shape index: {}]
  %s6 = inlined_call_operand.vmem [shape: f32[1,32], index: 6, kind: input, shape index: {}]
  %s7 = inlined_call_operand.vmem [shape: bf16[32,32], index: 7, kind: input, shape index: {}]
  %s8 = inlined_call_operand.vmem [shape: bf16[32,32], index: 8, kind: input, shape index: {}]
  %s9 = inlined_call_operand.vmem [shape: bf16[32,16], index: 9, kind: input, shape index: {}]
  %s10 = inlined_call_operand.vmem [shape: f32[1,16], index: 10, kind: input, shape index: {}]
  %s11 = inlined_call_operand.vmem [shape: f32[32,128], index: 11, kind: input, shape index: {}]
  %s12 = inlined_call_operand.vmem [shape: f32[128,32], index: 12, kind: input, shape index: {}]
  %s13 = inlined_call_operand.hbm [shape: f32[2,16], index: 13, kind: output, shape index: {}]
  %s14 = sld [smem:[#allocation0]]
  $region62: #{tpu_custom_call.1} parent=0
    _
  %s16 = ssub.s32 1, %s14
  %s17 = scalar_select 0, %s16, %s14
  $region1: #{tpu_custom_call.1} parent=0
    #allocation2 [shape = 'u8[1024]{0}', space=vmem, size = 0x400, scoped, tag = 'output window, operand 0, single buffered']
    #allocation3 [shape = 's32[1]{0}', space=sflag, size = 0x4, scoped, tag = 'scoped memory for tpu_custom_call.1']
    %18 = vsyncpa [#allocation3], 0
    // Predicated region
    $region2: #{tpu_custom_call.1} parent=1 // pred_check
      _
    $region3: #{tpu_custom_call.1} parent=1 // pred_check_branch
      %20 = sbr.rel (0) target = $region5
    $region4: #{tpu_custom_call.1} parent=1 // pred_region
      _
    $region5: #{tpu_custom_call.1} parent=1 // pred_fallthru
      _
    // Predicated region
    $region6: #{tpu_custom_call.1} parent=1 // pred_check
      _
    $region7: #{tpu_custom_call.1} parent=1 // pred_check_branch
      %22 = sbr.rel (0) target = $region9
    $region8: #{tpu_custom_call.1} parent=1 // pred_region
      _
    $region9: #{tpu_custom_call.1} parent=1 // pred_fallthru
      _
    // Predicated region
    $region10: #{tpu_custom_call.1} parent=1 // pred_check
      _
    $region11: #{tpu_custom_call.1} parent=1 // pred_check_branch
      %24 = sbr.rel (0) target = $region13
    $region12: #{tpu_custom_call.1} parent=1 // pred_region
      _
    $region13: #{tpu_custom_call.1} parent=1 // pred_fallthru
      _
    // Predicated region
    $region14: #{tpu_custom_call.1} parent=1 // pred_check
      _
    $region15: #{tpu_custom_call.1} parent=1 // pred_check_branch
      %26 = sbr.rel (0) target = $region17
    $region16: #{tpu_custom_call.1} parent=1 // pred_region
      _
    $region17: #{tpu_custom_call.1} parent=1 // pred_fallthru
      _
    // Predicated region
    $region18: #{tpu_custom_call.1} parent=1 // pred_check
      _
    $region19: #{tpu_custom_call.1} parent=1 // pred_check_branch
      %28 = sbr.rel (0) target = $region21
    $region20: #{tpu_custom_call.1} parent=1 // pred_region
      _
    $region21: #{tpu_custom_call.1} parent=1 // pred_fallthru
      _
    // Predicated region
    $region22: #{tpu_custom_call.1} parent=1 // pred_check
      _
    $region23: #{tpu_custom_call.1} parent=1 // pred_check_branch
      %30 = sbr.rel (0) target = $region25
    $region24: #{tpu_custom_call.1} parent=1 // pred_region
      _
    $region25: #{tpu_custom_call.1} parent=1 // pred_fallthru
      _
    // Predicated region
    $region26: #{tpu_custom_call.1} parent=1 // pred_check
      _
    $region27: #{tpu_custom_call.1} parent=1 // pred_check_branch
      %32 = sbr.rel (0) target = $region29
    $region28: #{tpu_custom_call.1} parent=1 // pred_region
      _
    $region29: #{tpu_custom_call.1} parent=1 // pred_fallthru
      _
    // Predicated region
    $region30: #{tpu_custom_call.1} parent=1 // pred_check
      _
    $region31: #{tpu_custom_call.1} parent=1 // pred_check_branch
      %34 = sbr.rel (0) target = $region33
    $region32: #{tpu_custom_call.1} parent=1 // pred_region
      _
    $region33: #{tpu_custom_call.1} parent=1 // pred_fallthru
      _
    // Predicated region
    $region34: #{tpu_custom_call.1} parent=1 // pred_check
      _
    $region35: #{tpu_custom_call.1} parent=1 // pred_check_branch
      %36 = sbr.rel (0) target = $region37
    $region36: #{tpu_custom_call.1} parent=1 // pred_region
      _
    $region37: #{tpu_custom_call.1} parent=1 // pred_fallthru
      _
    // Predicated region
    $region38: #{tpu_custom_call.1} parent=1 // pred_check
      _
    $region39: #{tpu_custom_call.1} parent=1 // pred_check_branch
      %38 = sbr.rel (0) target = $region41
    $region40: #{tpu_custom_call.1} parent=1 // pred_region
      _
    $region41: #{tpu_custom_call.1} parent=1 // pred_fallthru
      _
    // Predicated region
    $region42: #{tpu_custom_call.1} parent=1 // pred_check
      _
    $region43: #{tpu_custom_call.1} parent=1 // pred_check_branch
      %40 = sbr.rel (0) target = $region45
    $region44: #{tpu_custom_call.1} parent=1 // pred_region
      _
    $region45: #{tpu_custom_call.1} parent=1 // pred_fallthru
      _
    // Predicated region
    $region46: #{tpu_custom_call.1} parent=1 // pred_check
      _
    $region47: #{tpu_custom_call.1} parent=1 // pred_check_branch
      %42 = sbr.rel (0) target = $region49
    $region48: #{tpu_custom_call.1} parent=1 // pred_region
      _
    $region49: #{tpu_custom_call.1} parent=1 // pred_fallthru
      _
    // Predicated region
    $region50: #{tpu_custom_call.1} parent=1 // pred_check
      _
    $region51: #{tpu_custom_call.1} parent=1 // pred_check_branch
      %44 = sbr.rel (0) target = $region53
    $region52: #{tpu_custom_call.1} parent=1 // pred_region
      _
    $region53: #{tpu_custom_call.1} parent=1 // pred_fallthru
      _
    %v46 = vld [vmem:[%s0] sm:$0xff]
    %v47 = vld [vmem:[%s0 + $0x8] sm:$0xff]
    %v48 = vld [vmem:[%s0 + $0x10] sm:$0xff]
    %v49 = vld [vmem:[%s0 + $0x18] sm:$0xff]
    %v50 = vpack.c.bf16 %v46, %v46
    %v51 = vpack.c.bf16 %v47, %v47
    %v52 = vpack.c.bf16 %v48, %v48
    %v53 = vpack.c.bf16 %v49, %v49
    %v54 = vld [vmem:[%s7] sm:$0xf]
    %v55 = vld [vmem:[%s7 + $0x4] sm:$0xf]
    %v56 = vld [vmem:[%s7 + $0x8] sm:$0xf]
    %v57 = vld [vmem:[%s7 + $0xc] sm:$0xf]
    %v62 = vunpack.c.l.b16 %v50
    %v63 = vunpack.c.l.b16 %v51
    %v64 = vunpack.c.l.b16 %v52
    %v65 = vunpack.c.l.b16 %v53
    %v66 = vpack.c.b16 %v63, %v62
    %v67 = vpack.c.b16 %v65, %v64
    %v72 = vunpack.c.l.b16 %v54
    %v73 = vunpack.c.l.b16 %v55
    %v74 = vunpack.c.l.b16 %v56
    %v75 = vunpack.c.l.b16 %v57
    %v76 = vpack.c.b16 %v73, %v72
    %v77 = vpack.c.b16 %v75, %v74
    %vm80 = vcmask 261120
    %v82 = vsel %vm80, %v66, 0
    %v85 = vsel %vm80, %v67, 0
    %87 = vmatpush.bf16.msra.mxu0 0
    %88 = vmatpush.bf16.msra.mxu0 0
    %89 = vmatpush.bf16.msra.mxu0 0
    %90 = vmatpush.bf16.msra.mxu0 0
    %91 = vmatpush.bf16.msra.mxu0 0
    %92 = vmatpush.bf16.msra.mxu0 0
    %93 = vmatpush.bf16.msra.mxu0 %v77
    %94 = vmatpush.bf16.msra.mxu0 %v76
    %95 = vmatmul.bf16.gmra.mxu0 %v82
    %v96 = vpop.f32.mrf.mxu0
    %v97 = vadd.f32 0.0, %v96
    %v98 = vpop.f32.mrf.mxu0
    %v99 = vadd.f32 0.0, %v98
    %100 = vmatmul.bf16.gmra.mxu0 %v85
    %v101 = vpop.f32.mrf.mxu0
    %v102 = vadd.f32 0.0, %v101
    %v103 = vpop.f32.mrf.mxu0
    %v104 = vadd.f32 0.0, %v103
    %105 = vdwg.mxu0
    %v106 = vld [vmem:[%s1] sm:$0xff]
    %v107 = vld [vmem:[%s1 + $0x8] sm:$0xff]
    %v108 = vadd.f32 %v97, %v106
    %v109 = vadd.f32 %v99, %v107
    %v110 = vadd.f32 %v102, %v106
    %v111 = vadd.f32 %v104, %v107
    %v112 = vld [vmem:[%s8] sm:$0xf]
    %v113 = vld [vmem:[%s8 + $0x4] sm:$0xf]
    %v114 = vld [vmem:[%s8 + $0x8] sm:$0xf]
    %v115 = vld [vmem:[%s8 + $0xc] sm:$0xf]
    %v120 = vunpack.c.l.b16 %v112
    %v121 = vunpack.c.l.b16 %v113
    %v122 = vunpack.c.l.b16 %v114
    %v123 = vunpack.c.l.b16 %v115
    %v124 = vpack.c.b16 %v121, %v120
    %v125 = vpack.c.b16 %v123, %v122
    %128 = vmatpush.bf16.msra.mxu0 0
    %129 = vmatpush.bf16.msra.mxu0 0
    %130 = vmatpush.bf16.msra.mxu0 0
    %131 = vmatpush.bf16.msra.mxu0 0
    %132 = vmatpush.bf16.msra.mxu0 0
    %133 = vmatpush.bf16.msra.mxu0 0
    %134 = vmatpush.bf16.msra.mxu0 %v125
    %135 = vmatpush.bf16.msra.mxu0 %v124
    %136 = vmatmul.bf16.gmra.mxu0 %v82
    %v137 = vpop.f32.mrf.mxu0
    %v138 = vadd.f32 0.0, %v137
    %v139 = vpop.f32.mrf.mxu0
    %v140 = vadd.f32 0.0, %v139
    %141 = vmatmul.bf16.gmra.mxu0 %v85
    %v142 = vpop.f32.mrf.mxu0
    %v143 = vadd.f32 0.0, %v142
    %v144 = vpop.f32.mrf.mxu0
    %v145 = vadd.f32 0.0, %v144
    %146 = vdwg.mxu0
    %v147 = vld [vmem:[%s2] sm:$0xff]
    %v148 = vld [vmem:[%s2 + $0x8] sm:$0xff]
    %v149 = vadd.f32 %v138, %v147
    %v150 = vadd.f32 %v140, %v148
    %v151 = vadd.f32 %v143, %v147
    %v152 = vadd.f32 %v145, %v148
    %v153 = vsel %vm80, %v46, 0.0
    %v154 = vsel %vm80, %v47, 0.0
    %v155 = vadd.f32 %v153, %v154
    %v156 = vrot.slane %v155, 4
    %v157 = vadd.f32 %v155, %v156
    %v158 = vrot.slane %v157, 2
    %v159 = vadd.f32 %v157, %v158
    %v160 = vrot.slane %v159, 1
    %v161 = vadd.f32 %v159, %v160
    %v162 = vsel %vm80, %v48, 0.0
    %v163 = vsel %vm80, %v49, 0.0
    %v164 = vadd.f32 %v162, %v163
    %v165 = vrot.slane %v164, 4
    %v166 = vadd.f32 %v164, %v165
    %v167 = vrot.slane %v166, 2
    %v168 = vadd.f32 %v166, %v167
    %v169 = vrot.slane %v168, 1
    %v170 = vadd.f32 %v168, %v169
    %v171 = vrcp.pop 16.0
    %v172 = vmul.f32 16.0, %v171
    %v173 = vsub.f32 1.0, %v172
    %v174 = vmul.f32 %v171, %v173
    %v175 = vadd.f32 %v171, %v174
    %vm176 = vweird.f32 %v171
    %v177 = vsel %vm176, %v171, %v175
    %v178 = vmul.f32 %v161, %v177
    %v179 = vmul.f32 %v170, %v177
    %v180 = vpack.c.bf16 %v178, %v178
    %v181 = vpack.c.bf16 %v179, %v179
    %v182 = vld [vmem:[%s5] sm:$0xf]
    %v183 = vld [vmem:[%s5 + $0x4] sm:$0xf]
    %v184 = vld [vmem:[%s5 + $0x8] sm:$0xf]
    %v185 = vld [vmem:[%s5 + $0xc] sm:$0xf]
    %v186 = vld [vmem:[%s6] sm:$0x1]
    %v188 = vperm.slane %v186, 0
    %v192 = vunpack.c.l.b16 %v180
    %v193 = vunpack.c.l.b16 %v181
    %vm194 = vcmask 1041409
    %v195 = vsel %vm194, %v193, %v192
    %v196 = vpack.c.b16 %v195, %v195
    %v201 = vunpack.c.l.b16 %v182
    %v202 = vunpack.c.l.b16 %v183
    %v203 = vunpack.c.l.b16 %v184
    %v204 = vunpack.c.l.b16 %v185
    %v205 = vpack.c.b16 %v202, %v201
    %v206 = vpack.c.b16 %v204, %v203
    %v210 = vsel %vm80, %v196, 0
    %212 = vmatpush.bf16.msra.mxu0 0
    %213 = vmatpush.bf16.msra.mxu0 0
    %214 = vmatpush.bf16.msra.mxu0 0
    %215 = vmatpush.bf16.msra.mxu0 0
    %216 = vmatpush.bf16.msra.mxu0 0
    %217 = vmatpush.bf16.msra.mxu0 0
    %218 = vmatpush.bf16.msra.mxu0 %v206
    %219 = vmatpush.bf16.msra.mxu0 %v205
    %220 = vmatmul.bf16.gmra.mxu0 %v210
    %v221 = vpop.f32.mrf.mxu0
    %v222 = vadd.f32 %v188, %v221
    %v223 = vpop.f32.mrf.mxu0
    %224 = vdwg.mxu0
    %v225 = vsel %vm80, %v108, 0.0
    %v226 = vsel %vm80, %v109, 0.0
    %v227 = vadd.f32 %v225, %v226
    %v228 = vrot.slane %v227, 4
    %v229 = vadd.f32 %v227, %v228
    %v230 = vrot.slane %v229, 2
    %v231 = vadd.f32 %v229, %v230
    %v232 = vrot.slane %v231, 1
    %v233 = vadd.f32 %v231, %v232
    %v234 = vsel %vm80, %v110, 0.0
    %v235 = vsel %vm80, %v111, 0.0
    %v236 = vadd.f32 %v234, %v235
    %v237 = vrot.slane %v236, 4
    %v238 = vadd.f32 %v236, %v237
    %v239 = vrot.slane %v238, 2
    %v240 = vadd.f32 %v238, %v239
    %v241 = vrot.slane %v240, 1
    %v242 = vadd.f32 %v240, %v241
    %v243 = vmul.f32 %v233, %v177
    %v244 = vmul.f32 %v242, %v177
    %v245 = vld [vmem:[%s3] sm:$0x1]
    %v247 = vperm.slane %v245, 0
    %v249 = vadd.f32 %v243, %v247
    %v250 = vadd.f32 %v244, %v247
    %v251 = vsel %vm80, %v149, 0.0
    %v252 = vsel %vm80, %v150, 0.0
    %v253 = vadd.f32 %v251, %v252
    %v254 = vrot.slane %v253, 4
    %v255 = vadd.f32 %v253, %v254
    %v256 = vrot.slane %v255, 2
    %v257 = vadd.f32 %v255, %v256
    %v258 = vrot.slane %v257, 1
    %v259 = vadd.f32 %v257, %v258
    %v260 = vsel %vm80, %v151, 0.0
    %v261 = vsel %vm80, %v152, 0.0
    %v262 = vadd.f32 %v260, %v261
    %v263 = vrot.slane %v262, 4
    %v264 = vadd.f32 %v262, %v263
    %v265 = vrot.slane %v264, 2
    %v266 = vadd.f32 %v264, %v265
    %v267 = vrot.slane %v266, 1
    %v268 = vadd.f32 %v266, %v267
    %v269 = vmul.f32 %v259, %v177
    %v270 = vmul.f32 %v268, %v177
    %v271 = vld [vmem:[%s4] sm:$0x1]
    %v273 = vperm.slane %v271, 0
    %v275 = vadd.f32 %v269, %v273
    %v276 = vadd.f32 %v270, %v273
    %v277 = vld [vmem:[%s11] sm:$0xff]
    %v278 = vld [vmem:[%s11 + $0x8] sm:$0xff]
    %v279 = vld [vmem:[%s11 + $0x10] sm:$0xff]
    %v280 = vld [vmem:[%s11 + $0x18] sm:$0xff]
    %v282 = vrot.slane %v222, 1
    %v285 = vmul.f32 %v249, %v222
    %v286 = vmul.f32 %v250, %v282
    %v289 = vrot.slane %v286, 7
    %v290 = vsel %vm194, %v289, %v285
    %v291 = vsel %vm80, %v290, 0
    %293 = vmatpush.msra.mxu0 0.0
    %294 = vmatpush.msra.mxu0 0.0
    %295 = vmatpush.msra.mxu0 0.0
    %296 = vmatpush.msra.mxu0 0.0
    %297 = vmatpush.msra.mxu0 0.0
    %298 = vmatpush.msra.mxu0 0.0
    %299 = vmatpush.msra.mxu0 0.0
    %300 = vmatpush.msra.mxu0 0.0
    %301 = vmatpush.msra.mxu0 0.0
    %302 = vmatpush.msra.mxu0 0.0
    %303 = vmatpush.msra.mxu0 0.0
    %304 = vmatpush.msra.mxu0 0.0
    %305 = vmatpush.msra.mxu0 %v280
    %306 = vmatpush.msra.mxu0 %v279
    %307 = vmatpush.msra.mxu0 %v278
    %308 = vmatpush.msra.mxu0 %v277
    %309 = vmatmul.f32.gmra.mxu0 %v291
    %v310 = vpop.f32.mrf.mxu0
    %v311 = vadd.f32 0.0, %v310
    %312 = vdwg.mxu0
    %v313 = vperm.slane %v222, 0
    %v314 = vperm.slane %v282, 0
    %v317 = vmul.f32 %v108, %v313
    %v318 = vmul.f32 %v109, %v313
    %v319 = vmul.f32 %v110, %v314
    %v320 = vmul.f32 %v111, %v314
    %v322 = vsel %vm80, %v317, 0
    %v325 = vsel %vm80, %v318, 0
    %v328 = vsel %vm80, %v319, 0
    %v331 = vsel %vm80, %v320, 0
    %333 = vmatpush.msra.mxu0 0.0
    %334 = vmatpush.msra.mxu0 0.0
    %335 = vmatpush.msra.mxu0 0.0
    %336 = vmatpush.msra.mxu0 0.0
    %337 = vmatpush.msra.mxu0 0.0
    %338 = vmatpush.msra.mxu0 0.0
    %339 = vmatpush.msra.mxu0 0.0
    %340 = vmatpush.msra.mxu0 0.0
    %341 = vmatpush.msra.mxu0 0.0
    %342 = vmatpush.msra.mxu0 0.0
    %343 = vmatpush.msra.mxu0 0.0
    %344 = vmatpush.msra.mxu0 0.0
    %345 = vmatpush.msra.mxu0 %v280
    %346 = vmatpush.msra.mxu0 %v279
    %347 = vmatpush.msra.mxu0 %v278
    %348 = vmatpush.msra.mxu0 %v277
    %349 = vmatmul.f32.gmra.mxu0 %v322
    %v350 = vpop.f32.mrf.mxu0
    %v351 = vadd.f32 0.0, %v350
    %352 = vmatmul.f32.gmra.mxu0 %v325
    %v353 = vpop.f32.mrf.mxu0
    %v354 = vadd.f32 0.0, %v353
    %355 = vmatmul.f32.gmra.mxu0 %v328
    %v356 = vpop.f32.mrf.mxu0
    %v357 = vadd.f32 0.0, %v356
    %358 = vmatmul.f32.gmra.mxu0 %v331
    %v359 = vpop.f32.mrf.mxu0
    %v360 = vadd.f32 0.0, %v359
    %361 = vdwg.mxu0
    %v362 = vmax.f32 %v351, %v354
    %v363 = vrot.slane %v362, 4
    %v364 = vmax.f32 %v362, %v363
    %v365 = vrot.slane %v364, 2
    %v366 = vmax.f32 %v364, %v365
    %v367 = vrot.slane %v366, 1
    %v368 = vmax.f32 %v366, %v367
    %v369 = vmax.f32 %v357, %v360
    %v370 = vrot.slane %v369, 4
    %v371 = vmax.f32 %v369, %v370
    %v372 = vrot.slane %v371, 2
    %v373 = vmax.f32 %v371, %v372
    %v374 = vrot.slane %v373, 1
    %v375 = vmax.f32 %v373, %v374
    %v378 = vsel %vm194, %v375, %v368
    %v380 = vmax.f32 %v311, %v378
    %v381 = vsub.f32 %v311, %v380
    %v382 = vmul.f32 %v381, 1.442695
    %v383 = vpow.pop %v382
    %v385 = vrot.slane %v380, 1
    %v386 = vperm.slane %v380, 0
    %v387 = vperm.slane %v385, 0
    %v390 = vsub.f32 %v351, %v386
    %v391 = vsub.f32 %v354, %v386
    %v392 = vsub.f32 %v357, %v387
    %v393 = vsub.f32 %v360, %v387
    %v394 = vmul.f32 %v390, 1.442695
    %v395 = vpow.pop %v394
    %v396 = vmul.f32 %v391, 1.442695
    %v397 = vpow.pop %v396
    %v398 = vmul.f32 %v392, 1.442695
    %v399 = vpow.pop %v398
    %v400 = vmul.f32 %v393, 1.442695
    %v401 = vpow.pop %v400
    %v402 = vadd.f32 %v395, %v397
    %v403 = vrot.slane %v402, 4
    %v404 = vadd.f32 %v402, %v403
    %v405 = vrot.slane %v404, 2
    %v406 = vadd.f32 %v404, %v405
    %v407 = vrot.slane %v406, 1
    %v408 = vadd.f32 %v406, %v407
    %v409 = vadd.f32 %v399, %v401
    %v410 = vrot.slane %v409, 4
    %v411 = vadd.f32 %v409, %v410
    %v412 = vrot.slane %v411, 2
    %v413 = vadd.f32 %v411, %v412
    %v414 = vrot.slane %v413, 1
    %v415 = vadd.f32 %v413, %v414
    %v418 = vsel %vm194, %v415, %v408
    %v420 = vadd.f32 %v383, %v418
    %v421 = vrcp.pop %v420
    %v422 = vmul.f32 %v383, %v421
    %v424 = vrot.slane %v421, 1
    %v425 = vperm.slane %v421, 0
    %v426 = vperm.slane %v424, 0
    %v429 = vmul.f32 %v395, %v425
    %v430 = vmul.f32 %v397, %v425
    %v431 = vmul.f32 %v399, %v426
    %v432 = vmul.f32 %v401, %v426
    %v433 = vld [vmem:[%s12] sm:$0xff]
    %v434 = vld [vmem:[%s12 + $0x8] sm:$0xff]
    %v435 = vld [vmem:[%s12 + $0x10] sm:$0xff]
    %v436 = vld [vmem:[%s12 + $0x18] sm:$0xff]
    %v437 = vld [vmem:[%s12 + $0x20] sm:$0xff]
    %v438 = vld [vmem:[%s12 + $0x28] sm:$0xff]
    %v439 = vld [vmem:[%s12 + $0x30] sm:$0xff]
    %v440 = vld [vmem:[%s12 + $0x38] sm:$0xff]
    %v441 = vld [vmem:[%s12 + $0x40] sm:$0xff]
    %v442 = vld [vmem:[%s12 + $0x48] sm:$0xff]
    %v443 = vld [vmem:[%s12 + $0x50] sm:$0xff]
    %v444 = vld [vmem:[%s12 + $0x58] sm:$0xff]
    %v445 = vld [vmem:[%s12 + $0x60] sm:$0xff]
    %v446 = vld [vmem:[%s12 + $0x68] sm:$0xff]
    %v447 = vld [vmem:[%s12 + $0x70] sm:$0xff]
    %v448 = vld [vmem:[%s12 + $0x78] sm:$0xff]
    %449 = vmatpush.msra.mxu0 %v448
    %450 = vmatpush.msra.mxu0 %v447
    %451 = vmatpush.msra.mxu0 %v446
    %452 = vmatpush.msra.mxu0 %v445
    %453 = vmatpush.msra.mxu0 %v444
    %454 = vmatpush.msra.mxu0 %v443
    %455 = vmatpush.msra.mxu0 %v442
    %456 = vmatpush.msra.mxu0 %v441
    %457 = vmatpush.msra.mxu0 %v440
    %458 = vmatpush.msra.mxu0 %v439
    %459 = vmatpush.msra.mxu0 %v438
    %460 = vmatpush.msra.mxu0 %v437
    %461 = vmatpush.msra.mxu0 %v436
    %462 = vmatpush.msra.mxu0 %v435
    %463 = vmatpush.msra.mxu0 %v434
    %464 = vmatpush.msra.mxu0 %v433
    %465 = vmatmul.f32.gmra.mxu0 %v422
    %v466 = vpop.f32.mrf.mxu0
    %v467 = vadd.f32 0.0, %v466
    %468 = vdwg.mxu0
    %469 = vmatpush.msra.mxu0 %v448
    %470 = vmatpush.msra.mxu0 %v447
    %471 = vmatpush.msra.mxu0 %v446
    %472 = vmatpush.msra.mxu0 %v445
    %473 = vmatpush.msra.mxu0 %v444
    %474 = vmatpush.msra.mxu0 %v443
    %475 = vmatpush.msra.mxu0 %v442
    %476 = vmatpush.msra.mxu0 %v441
    %477 = vmatpush.msra.mxu0 %v440
    %478 = vmatpush.msra.mxu0 %v439
    %479 = vmatpush.msra.mxu0 %v438
    %480 = vmatpush.msra.mxu0 %v437
    %481 = vmatpush.msra.mxu0 %v436
    %482 = vmatpush.msra.mxu0 %v435
    %483 = vmatpush.msra.mxu0 %v434
    %484 = vmatpush.msra.mxu0 %v433
    %485 = vmatmul.f32.gmra.mxu0 %v429
    %v486 = vpop.f32.mrf.mxu0
    %v487 = vadd.f32 0.0, %v486
    %488 = vmatmul.f32.gmra.mxu0 %v430
    %v489 = vpop.f32.mrf.mxu0
    %v490 = vadd.f32 0.0, %v489
    %491 = vmatmul.f32.gmra.mxu0 %v431
    %v492 = vpop.f32.mrf.mxu0
    %v493 = vadd.f32 0.0, %v492
    %494 = vmatmul.f32.gmra.mxu0 %v432
    %v495 = vpop.f32.mrf.mxu0
    %v496 = vadd.f32 0.0, %v495
    %497 = vdwg.mxu0
    %v500 = vrot.slane %v276, 7
    %v501 = vsel %vm194, %v500, %v275
    %v503 = vmul.f32 %v467, %v501
    %v504 = vmul.f32 %v487, %v149
    %v505 = vmul.f32 %v490, %v150
    %v506 = vmul.f32 %v493, %v151
    %v507 = vmul.f32 %v496, %v152
    %v508 = vsel %vm80, %v504, 0.0
    %v509 = vsel %vm80, %v505, 0.0
    %v510 = vadd.f32 %v508, %v509
    %v511 = vrot.slane %v510, 4
    %v512 = vadd.f32 %v510, %v511
    %v513 = vrot.slane %v512, 2
    %v514 = vadd.f32 %v512, %v513
    %v515 = vrot.slane %v514, 1
    %v516 = vadd.f32 %v514, %v515
    %v517 = vsel %vm80, %v506, 0.0
    %v518 = vsel %vm80, %v507, 0.0
    %v519 = vadd.f32 %v517, %v518
    %v520 = vrot.slane %v519, 4
    %v521 = vadd.f32 %v519, %v520
    %v522 = vrot.slane %v521, 2
    %v523 = vadd.f32 %v521, %v522
    %v524 = vrot.slane %v523, 1
    %v525 = vadd.f32 %v523, %v524
    %v528 = vsel %vm194, %v525, %v516
    %v530 = vadd.f32 %v503, %v528
    %v531 = vpack.c.bf16 %v530, %v530
    %v532 = vld [vmem:[%s9] sm:$0xf]
    %v533 = vld [vmem:[%s9 + $0x4] sm:$0xf]
    %v534 = vld [vmem:[%s9 + $0x8] sm:$0xf]
    %v535 = vld [vmem:[%s9 + $0xc] sm:$0xf]
    %v536 = vld [vmem:[%s10] sm:$0x1]
    %v538 = vperm.slane %v536, 0
    %v544 = vunpack.c.l.b16 %v532
    %v545 = vunpack.c.l.b16 %v533
    %v546 = vunpack.c.l.b16 %v534
    %v547 = vunpack.c.l.b16 %v535
    %v548 = vpack.c.b16 %v545, %v544
    %v549 = vpack.c.b16 %v547, %v546
    %v553 = vsel %vm80, %v531, 0
    %555 = vmatpush.bf16.msra.mxu0 0
    %556 = vmatpush.bf16.msra.mxu0 0
    %557 = vmatpush.bf16.msra.mxu0 0
    %558 = vmatpush.bf16.msra.mxu0 0
    %559 = vmatpush.bf16.msra.mxu0 0
    %560 = vmatpush.bf16.msra.mxu0 0
    %561 = vmatpush.bf16.msra.mxu0 %v549
    %562 = vmatpush.bf16.msra.mxu0 %v548
    %563 = vmatmul.bf16.gmra.mxu0 %v553
    %v564 = vpop.f32.mrf.mxu0
    %v565 = vadd.f32 %v538, %v564
    %v566 = vpop.f32.mrf.mxu0
    %567 = vdwg.mxu0
    %vm568 = vcmask 123904
    %569 = vst.msk [vmem:[#allocation2] sm:$0x3] %vm568, %v565
    // Predicated region
    $region54: #{tpu_custom_call.1} parent=1 // pred_check
      _
    $region55: #{tpu_custom_call.1} parent=1 // pred_check_branch
      %571 = sbr.rel (0) target = $region57
    $region56: #{tpu_custom_call.1} parent=1 // pred_region
      %573 = vsyncadd [#allocation3], 0
      %s575 = sshll.u32 [#allocation2], 4
      %s576 = int_to_ptr.vmem [resolvable:$true] %s575
      %s577 = sshll.u32 %s13, 4
      %s578 = int_to_ptr.hbm [resolvable:$true] %s577
      %580 = dma.vmem_to_hbm [thread:$0]  %s576, 32, %s578, [#allocation3]
    $region57: #{tpu_custom_call.1} parent=1 // pred_fallthru
      _
    // Predicated region
    $region58: #{tpu_custom_call.1} parent=1 // pred_check
      _
    $region59: #{tpu_custom_call.1} parent=1 // pred_check_branch
      %582 = sbr.rel (0) target = $region61
    $region60: #{tpu_custom_call.1} parent=1 // pred_region
      %584 = dma.done [#allocation3], 32
    $region61: #{tpu_custom_call.1} parent=1 // pred_fallthru
      _
    %585 = vsyncpa [#allocation3], 1

</llo_original>
